<compile_context>
chip_gen: v5e
topology: v5e:2x2
jax: 0.10.0
libtpu: 0.0.40
codegen_flags: <defaults>
</compile_context>

<pallas_src>
import functools

import jax
import jax.numpy as jnp
import numpy as np
from jax import lax
from jax.experimental import pallas as pl
from jax.experimental.pallas import tpu as pltpu


def _round_up(x, m):
    return ((x + m - 1) // m) * m


# ----------------------------------------------------------------------------
# Fused Pallas kernel: motion GRU + feature head + tracking GRU + output head
# ----------------------------------------------------------------------------
def _fused_tracking_kernel(x_ref, h0_ref, mbuf_ref, tbuf_ref, out_ref, *,
                           S, BP, H, Fp, Dp1, Dp2):
    """x_ref   : (S*BP, Dp1)  time-major flattened motion input (row t*BP + b)
       h0_ref  : (BP, H)      motion GRU initial hidden state (mtensor, batch-padded)
       mbuf_ref: (Dp1+2H+8, 3H) packed motion layer params
       tbuf_ref: (Dp2+2H+8, 3H) packed tracking layer params
       out_ref : (S*BP, Fp)
       Packed layout per layer (rows): [Wih_cat | Whh_cat | Wf(padded) | bias block]
       bias block rows: 0 = [bih_r+bhh_r | bih_z+bhh_z | bih_n], 1 = bhh_n, 2 = bf.
    """
    C = 3 * H

    def unpack(buf_ref, Dp):
        wih = buf_ref[0:Dp, :]                          # (Dp, 3H)
        whh = buf_ref[Dp:Dp + H, :]                     # (H, 3H)
        wf = buf_ref[Dp + H:Dp + 2 * H, 0:Fp]           # (H, Fp)
        bias = buf_ref[Dp + 2 * H:Dp + 2 * H + 8, :]    # (8, 3H)
        b = bias[0:1, :]                                # (1, 3H)
        bhn = bias[1:2, 0:H]                            # (1, H)
        bf = bias[2:3, 0:Fp]                            # (1, Fp)
        return wih, whh, wf, b, bhn, bf

    wih1, whh1, wf1, b1, bhn1, bf1 = unpack(mbuf_ref, Dp1)
    wih2, whh2, wf2, b2, bhn2, bf2 = unpack(tbuf_ref, Dp2)

    # Hoisted, batched motion input projection: one (S*BP, Dp1)@(Dp1, 3H) matmul,
    # independent of the recurrence.
    a1 = jnp.dot(x_ref[...], wih1, preferred_element_type=jnp.float32) + b1   # (S*BP, 3H)

    def gru_step(a_t, h_prev, whh, bhn):
        # Single fused 3-gate matmul on the serial chain (gate lanes: r | z | n).
        hg = jnp.dot(h_prev, whh, preferred_element_type=jnp.float32)         # (BP, 3H)
        rz = jax.nn.sigmoid(a_t[:, :2 * H] + hg[:, :2 * H])                   # one EUP pass
        r = rz[:, :H]
        z = rz[:, H:]
        n = jnp.tanh(a_t[:, 2 * H:] + r * (hg[:, 2 * H:] + bhn))
        return (1.0 - z) * n + z * h_prev

    h1 = h0_ref[...]                                   # motion hidden state
    h2 = jnp.zeros((BP, H), jnp.float32)               # tracking hidden state
    outs = []
    # Fully unrolled, interleaved recurrences: motion step t+1 is independent of
    # tracking step t, giving the LLO scheduler two overlapping dependency chains.
    for t in range(S):
        lo = t * BP                                    # multiple of 8 (BP padded)
        h1 = gru_step(a1[lo:lo + BP, :], h1, whh1, bhn1)
        mfeat = jnp.tanh(
            jnp.dot(h1, wf1, preferred_element_type=jnp.float32) + bf1)       # (BP, Fp)
        a2 = jnp.dot(mfeat, wih2, preferred_element_type=jnp.float32) + b2    # (BP, 3H)
        h2 = gru_step(a2, h2, whh2, bhn2)
        outs.append(jnp.tanh(
            jnp.dot(h2, wf2, preferred_element_type=jnp.float32) + bf2))      # (BP, Fp)

    # Hidden states / outputs never touch VMEM scratch; single whole-output store.
    out_ref[...] = jnp.concatenate(outs, axis=0)


# ----------------------------------------------------------------------------
# Wrapper: pack params, pad batch, call the kernel
# ----------------------------------------------------------------------------
def _pack_layer(params, H, Fp, Dp):
    """Pack one layer's 6 tensors into a single f32 buffer with 8-aligned sections."""
    wih, whh, bih, bhh = params['wih'], params['whh'], params['bih'], params['bhh']
    wf, bf = params['wf'], params['bf']
    Din = wih.shape[1]
    F = wf.shape[-1]
    C = 3 * H
    wih_cat = jnp.concatenate([wih[0], wih[1], wih[2]], axis=1)                # (Din, 3H)
    wih_pad = jnp.zeros((Dp, C), jnp.float32).at[:Din].set(wih_cat)
    whh_cat = jnp.concatenate([whh[0], whh[1], whh[2]], axis=1)                # (H, 3H)
    wf_pad = jnp.zeros((H, C), jnp.float32).at[:, :F].set(wf)
    bias = jnp.zeros((8, C), jnp.float32)
    bias = bias.at[0:1, :].set(
        jnp.concatenate([bih[0] + bhh[0], bih[1] + bhh[1], bih[2]], axis=1))   # r/z biases pre-combined
    bias = bias.at[1:2, :H].set(bhh[2])                                        # b_hh_n (scaled by r)
    bias = bias.at[2:3, :F].set(bf)
    return jnp.concatenate([wih_pad, whh_cat, wf_pad, bias], axis=0)           # (Dp+2H+8, 3H)


def tracking_forward_pallas(msequence, mtensor, motion, tracking):
    """Full TrackingModel forward (use_motion=True, use_appearance=False).

    msequence : (S, B, D) time-major motion input
    mtensor   : (B, H)    motion GRU initial hidden state
    returns   : (S, B, F)
    """
    S, B, D = msequence.shape
    H = motion['whh'].shape[-1]
    F = motion['wf'].shape[-1]
    BP = _round_up(max(B, 8), 8)      # sublane-aligned batch (extra rows are free on MXU)
    Dp = _round_up(D, 8)
    Fp = _round_up(F, 8)

    mbuf = _pack_layer(motion, H, Fp, Dp)     # (Dp+2H+8, 3H)
    tbuf = _pack_layer(tracking, H, Fp, Fp)   # (Fp+2H+8, 3H)

    # Time-major flatten with batch padded to BP (row t*BP + b), cols padded to Dp.
    x = jnp.zeros((S, BP, Dp), jnp.float32).at[:, :B, :D].set(msequence)
    x_flat = x.reshape(S * BP, Dp)
    h0 = jnp.zeros((BP, H), jnp.float32).at[:B].set(mtensor)

    kernel = functools.partial(_fused_tracking_kernel,
                               S=S, BP=BP, H=H, Fp=Fp, Dp1=Dp, Dp2=Fp)
    vmem = pl.BlockSpec(memory_space=pltpu.MemorySpace.VMEM)
    out_flat = pl.pallas_call(
        kernel,
        out_shape=jax.ShapeDtypeStruct((S * BP, Fp), jnp.float32),
        in_specs=[vmem] * 4,
        out_specs=vmem,
    )(x_flat, h0, mbuf, tbuf)
    return out_flat.reshape(S, BP, Fp)[:, :B, :F]


_tracking_forward_jit = jax.jit(tracking_forward_pallas)


# ----------------------------------------------------------------------------
# Pure-JAX reference (for correctness checking of the kernel)
# ----------------------------------------------------------------------------
def gru_feature_ref(x, h0, wih, whh, bih, bhh, wf, bf):
    def step(h, xt):
        r = jax.nn.sigmoid(xt @ wih[0] + bih[0] + h @ whh[0] + bhh[0])
        z = jax.nn.sigmoid(xt @ wih[1] + bih[1] + h @ whh[1] + bhh[1])
        n = jnp.tanh(xt @ wih[2] + bih[2] + r * (h @ whh[2] + bhh[2]))
        h_new = (1.0 - z) * n + z * h
        feat = jnp.tanh(h_new @ wf + bf)
        return h_new, feat

    _, feats = lax.scan(step, h0, x)
    return feats


# ----------------------------------------------------------------------------
# TrackingModel (use_appearance=False, use_motion=True)
# ----------------------------------------------------------------------------
class TrackingModelPallas:
    def __init__(self, dict_args, key):
        self.mot_input_dim = dict_args['mot_input_dim']
        self.hidden_dim = dict_args['rnn_hdim']
        self.feature_dim = dict_args['feature_dim']
        # tracking input = motion feature_dim only (no appearance branch)
        self.tracking_input_dim = self.feature_dim

        def init(key, shape, scale=0.1):
            return scale * jax.random.normal(key, shape, dtype=jnp.float32)

        keys = jax.random.split(key, 12)
        D, H, F = self.mot_input_dim, self.hidden_dim, self.feature_dim
        # Motion layer (GRU + feature head); weights stacked per-gate (r, z, n).
        self.motion = dict(
            wih=init(keys[0], (3, D, H)), whh=init(keys[1], (3, H, H)),
            bih=init(keys[2], (3, 1, H)), bhh=init(keys[3], (3, 1, H)),
            wf=init(keys[4], (H, F)), bf=init(keys[5], (1, F)),
        )
        # Tracking layer (GRU + output head), input dim = F.
        self.tracking = dict(
            wih=init(keys[6], (3, F, H)), whh=init(keys[7], (3, H, H)),
            bih=init(keys[8], (3, 1, H)), bhh=init(keys[9], (3, 1, H)),
            wf=init(keys[10], (H, F)), bf=init(keys[11], (1, F)),
        )

    def forward(self, isequence, itensor, msequence, mtensor, ref=False):
        # use_appearance=False -> isequence/itensor unused (kept for signature parity)
        del isequence, itensor
        if ref:
            mfeat = gru_feature_ref(msequence, mtensor, **self.motion)
            h0_track = jnp.zeros((msequence.shape[1], self.hidden_dim), jnp.float32)
            return gru_feature_ref(mfeat, h0_track, **self.tracking)
        # TODO(synk): MotionModel's exact use of `mtensor` is not defined in the
        # given source; here it seeds the motion RNN's initial hidden state.
        return _tracking_forward_jit(msequence, mtensor, self.motion, self.tracking)


# ----------------------------------------------------------------------------
if __name__ == "__main__":
    key = jax.random.PRNGKey(0)
    k_param, k_ms, k_mt, k_is, k_it = jax.random.split(key, 5)

    dict_args = {
        'app_input_dim': 8,
        'mot_input_dim': 8,
        'rnn_hdim': 32,
        'rnn_type': 'gru',
        'feature_dim': 16,
    }
    S, B = 8, 4
    model = TrackingModelPallas(dict_args, k_param)

    msequence = jax.random.normal(k_ms, (S, B, dict_args['mot_input_dim']), jnp.float32)
    mtensor = jax.random.normal(k_mt, (B, dict_args['rnn_hdim']), jnp.float32)
    # appearance inputs unused with default config, but keep the 4-arg signature
    isequence = jax.random.normal(k_is, (S, B, dict_args['app_input_dim']), jnp.float32)
    itensor = jax.random.normal(k_it, (B, dict_args['rnn_hdim']), jnp.float32)

    out = model.forward(isequence, itensor, msequence, mtensor)
    out = jax.block_until_ready(out)

    ref = model.forward(isequence, itensor, msequence, mtensor, ref=True)
    np.testing.assert_allclose(np.asarray(out), np.asarray(ref), rtol=1e-4, atol=1e-4)

    assert out.shape == (S, B, dict_args['feature_dim'])
    print("KERNEL_OK")
</pallas_src>

<mosaic_0001>
module attributes {stable_mosaic.version = 11 : i64} {
  func.func @_fused_tracking_kernel(%arg0: memref<64x8xf32, #tpu.memory_space<vmem>>, %arg1: memref<8x32xf32, #tpu.memory_space<vmem>>, %arg2: memref<80x96xf32, #tpu.memory_space<vmem>>, %arg3: memref<88x96xf32, #tpu.memory_space<vmem>>, %arg4: memref<64x16xf32, #tpu.memory_space<vmem>>) attributes {dimension_semantics = [], scalar_prefetch = 0 : i64, scratch_operands = 0 : i64, tpu.core_type = #tpu.core_type<tc>} {
    %c0 = arith.constant 0 : index
    %c0_0 = arith.constant 0 : index
    %0 = vector.load %arg2[%c0, %c0_0] : memref<80x96xf32, #tpu.memory_space<vmem>>, vector<8x96xf32>
    %c8 = arith.constant 8 : index
    %c0_1 = arith.constant 0 : index
    %1 = vector.load %arg2[%c8, %c0_1] : memref<80x96xf32, #tpu.memory_space<vmem>>, vector<32x96xf32>
    %c40 = arith.constant 40 : index
    %c0_2 = arith.constant 0 : index
    %2 = vector.load %arg2[%c40, %c0_2] : memref<80x96xf32, #tpu.memory_space<vmem>>, vector<32x16xf32>
    %c72 = arith.constant 72 : index
    %c0_3 = arith.constant 0 : index
    %3 = vector.load %arg2[%c72, %c0_3] : memref<80x96xf32, #tpu.memory_space<vmem>>, vector<8x96xf32>
    %4 = vector.extract_strided_slice %3 {offsets = [0, 0], sizes = [1, 96], strides = [1, 1]} : vector<8x96xf32> to vector<1x96xf32>
    %5 = vector.extract_strided_slice %3 {offsets = [1, 0], sizes = [1, 32], strides = [1, 1]} : vector<8x96xf32> to vector<1x32xf32>
    %6 = vector.extract_strided_slice %3 {offsets = [2, 0], sizes = [1, 16], strides = [1, 1]} : vector<8x96xf32> to vector<1x16xf32>
    %c0_4 = arith.constant 0 : index
    %c0_5 = arith.constant 0 : index
    %7 = vector.load %arg3[%c0_4, %c0_5] : memref<88x96xf32, #tpu.memory_space<vmem>>, vector<16x96xf32>
    %c16 = arith.constant 16 : index
    %c0_6 = arith.constant 0 : index
    %8 = vector.load %arg3[%c16, %c0_6] : memref<88x96xf32, #tpu.memory_space<vmem>>, vector<32x96xf32>
    %c48 = arith.constant 48 : index
    %c0_7 = arith.constant 0 : index
    %9 = vector.load %arg3[%c48, %c0_7] : memref<88x96xf32, #tpu.memory_space<vmem>>, vector<32x16xf32>
    %c80 = arith.constant 80 : index
    %c0_8 = arith.constant 0 : index
    %10 = vector.load %arg3[%c80, %c0_8] : memref<88x96xf32, #tpu.memory_space<vmem>>, vector<8x96xf32>
    %11 = vector.extract_strided_slice %10 {offsets = [0, 0], sizes = [1, 96], strides = [1, 1]} : vector<8x96xf32> to vector<1x96xf32>
    %12 = vector.extract_strided_slice %10 {offsets = [1, 0], sizes = [1, 32], strides = [1, 1]} : vector<8x96xf32> to vector<1x32xf32>
    %13 = vector.extract_strided_slice %10 {offsets = [2, 0], sizes = [1, 16], strides = [1, 1]} : vector<8x96xf32> to vector<1x16xf32>
    %c0_9 = arith.constant 0 : index
    %c0_10 = arith.constant 0 : index
    %14 = vector.load %arg0[%c0_9, %c0_10] : memref<64x8xf32, #tpu.memory_space<vmem>>, vector<64x8xf32>
    %cst = arith.constant dense<0.000000e+00> : vector<64x96xf32>
    %15 = tpu.matmul %14, %0, %cst {dimension_numbers = #tpu.dot_dimension_numbers<[1], [0], [0], [1], [0, 0, 1, 1], [], []>} : vector<64x8xf32>, vector<8x96xf32>, vector<64x96xf32> -> vector<64x96xf32>
    %16 = vector.broadcast %4 : vector<1x96xf32> to vector<64x96xf32>
    %17 = arith.addf %15, %16 : vector<64x96xf32>
    %c0_11 = arith.constant 0 : index
    %c0_12 = arith.constant 0 : index
    %18 = vector.load %arg1[%c0_11, %c0_12] : memref<8x32xf32, #tpu.memory_space<vmem>>, vector<8x32xf32>
    %cst_13 = arith.constant 0.000000e+00 : f32
    %19 = vector.broadcast %cst_13 : f32 to vector<8x32xf32>
    %20 = vector.extract_strided_slice %17 {offsets = [0, 0], sizes = [8, 96], strides = [1, 1]} : vector<64x96xf32> to vector<8x96xf32>
    %cst_14 = arith.constant dense<0.000000e+00> : vector<8x96xf32>
    %21 = tpu.matmul %18, %1, %cst_14 {dimension_numbers = #tpu.dot_dimension_numbers<[1], [0], [0], [1], [0, 0, 1, 1], [], []>} : vector<8x32xf32>, vector<32x96xf32>, vector<8x96xf32> -> vector<8x96xf32>
    %22 = vector.extract_strided_slice %20 {offsets = [0, 0], sizes = [8, 64], strides = [1, 1]} : vector<8x96xf32> to vector<8x64xf32>
    %23 = vector.extract_strided_slice %21 {offsets = [0, 0], sizes = [8, 64], strides = [1, 1]} : vector<8x96xf32> to vector<8x64xf32>
    %24 = arith.addf %22, %23 : vector<8x64xf32>
    %25 = arith.negf %24 : vector<8x64xf32>
    %26 = math.exp %25 : vector<8x64xf32>
    %cst_15 = arith.constant 1.000000e+00 : f32
    %27 = vector.broadcast %cst_15 : f32 to vector<8x64xf32>
    %28 = arith.addf %27, %26 : vector<8x64xf32>
    %29 = arith.divf %27, %28 : vector<8x64xf32>
    %30 = vector.extract_strided_slice %29 {offsets = [0, 0], sizes = [8, 32], strides = [1, 1]} : vector<8x64xf32> to vector<8x32xf32>
    %31 = vector.extract_strided_slice %29 {offsets = [0, 32], sizes = [8, 32], strides = [1, 1]} : vector<8x64xf32> to vector<8x32xf32>
    %32 = vector.extract_strided_slice %20 {offsets = [0, 64], sizes = [8, 32], strides = [1, 1]} : vector<8x96xf32> to vector<8x32xf32>
    %33 = vector.extract_strided_slice %21 {offsets = [0, 64], sizes = [8, 32], strides = [1, 1]} : vector<8x96xf32> to vector<8x32xf32>
    %34 = vector.broadcast %5 : vector<1x32xf32> to vector<8x32xf32>
    %35 = arith.addf %33, %34 : vector<8x32xf32>
    %36 = arith.mulf %30, %35 : vector<8x32xf32>
    %37 = arith.addf %32, %36 : vector<8x32xf32>
    %38 = math.tanh %37 : vector<8x32xf32>
    %cst_16 = arith.constant 1.000000e+00 : f32
    %39 = vector.broadcast %cst_16 : f32 to vector<8x32xf32>
    %40 = arith.subf %39, %31 : vector<8x32xf32>
    %41 = arith.mulf %40, %38 : vector<8x32xf32>
    %42 = arith.mulf %31, %18 : vector<8x32xf32>
    %43 = arith.addf %41, %42 : vector<8x32xf32>
    %cst_17 = arith.constant dense<0.000000e+00> : vector<8x16xf32>
    %44 = tpu.matmul %43, %2, %cst_17 {dimension_numbers = #tpu.dot_dimension_numbers<[1], [0], [0], [1], [0, 0, 1, 1], [], []>} : vector<8x32xf32>, vector<32x16xf32>, vector<8x16xf32> -> vector<8x16xf32>
    %45 = vector.broadcast %6 : vector<1x16xf32> to vector<8x16xf32>
    %46 = arith.addf %44, %45 : vector<8x16xf32>
    %47 = math.tanh %46 : vector<8x16xf32>
    %cst_18 = arith.constant dense<0.000000e+00> : vector<8x96xf32>
    %48 = tpu.matmul %47, %7, %cst_18 {dimension_numbers = #tpu.dot_dimension_numbers<[1], [0], [0], [1], [0, 0, 1, 1], [], []>} : vector<8x16xf32>, vector<16x96xf32>, vector<8x96xf32> -> vector<8x96xf32>
    %49 = vector.broadcast %11 : vector<1x96xf32> to vector<8x96xf32>
    %50 = arith.addf %48, %49 : vector<8x96xf32>
    %cst_19 = arith.constant dense<0.000000e+00> : vector<8x96xf32>
    %51 = tpu.matmul %19, %8, %cst_19 {dimension_numbers = #tpu.dot_dimension_numbers<[1], [0], [0], [1], [0, 0, 1, 1], [], []>} : vector<8x32xf32>, vector<32x96xf32>, vector<8x96xf32> -> vector<8x96xf32>
    %52 = vector.extract_strided_slice %50 {offsets = [0, 0], sizes = [8, 64], strides = [1, 1]} : vector<8x96xf32> to vector<8x64xf32>
    %53 = vector.extract_strided_slice %51 {offsets = [0, 0], sizes = [8, 64], strides = [1, 1]} : vector<8x96xf32> to vector<8x64xf32>
    %54 = arith.addf %52, %53 : vector<8x64xf32>
    %55 = arith.negf %54 : vector<8x64xf32>
    %56 = math.exp %55 : vector<8x64xf32>
    %cst_20 = arith.constant 1.000000e+00 : f32
    %57 = vector.broadcast %cst_20 : f32 to vector<8x64xf32>
    %58 = arith.addf %57, %56 : vector<8x64xf32>
    %59 = arith.divf %57, %58 : vector<8x64xf32>
    %60 = vector.extract_strided_slice %59 {offsets = [0, 0], sizes = [8, 32], strides = [1, 1]} : vector<8x64xf32> to vector<8x32xf32>
    %61 = vector.extract_strided_slice %59 {offsets = [0, 32], sizes = [8, 32], strides = [1, 1]} : vector<8x64xf32> to vector<8x32xf32>
    %62 = vector.extract_strided_slice %50 {offsets = [0, 64], sizes = [8, 32], strides = [1, 1]} : vector<8x96xf32> to vector<8x32xf32>
    %63 = vector.extract_strided_slice %51 {offsets = [0, 64], sizes = [8, 32], strides = [1, 1]} : vector<8x96xf32> to vector<8x32xf32>
    %64 = vector.broadcast %12 : vector<1x32xf32> to vector<8x32xf32>
    %65 = arith.addf %63, %64 : vector<8x32xf32>
    %66 = arith.mulf %60, %65 : vector<8x32xf32>
    %67 = arith.addf %62, %66 : vector<8x32xf32>
    %68 = math.tanh %67 : vector<8x32xf32>
    %cst_21 = arith.constant 1.000000e+00 : f32
    %69 = vector.broadcast %cst_21 : f32 to vector<8x32xf32>
    %70 = arith.subf %69, %61 : vector<8x32xf32>
    %71 = arith.mulf %70, %68 : vector<8x32xf32>
    %72 = arith.mulf %61, %19 : vector<8x32xf32>
    %73 = arith.addf %71, %72 : vector<8x32xf32>
    %cst_22 = arith.constant dense<0.000000e+00> : vector<8x16xf32>
    %74 = tpu.matmul %73, %9, %cst_22 {dimension_numbers = #tpu.dot_dimension_numbers<[1], [0], [0], [1], [0, 0, 1, 1], [], []>} : vector<8x32xf32>, vector<32x16xf32>, vector<8x16xf32> -> vector<8x16xf32>
    %75 = vector.broadcast %13 : vector<1x16xf32> to vector<8x16xf32>
    %76 = arith.addf %74, %75 : vector<8x16xf32>
    %77 = math.tanh %76 : vector<8x16xf32>
    %78 = vector.extract_strided_slice %17 {offsets = [8, 0], sizes = [8, 96], strides = [1, 1]} : vector<64x96xf32> to vector<8x96xf32>
    %cst_23 = arith.constant dense<0.000000e+00> : vector<8x96xf32>
    %79 = tpu.matmul %43, %1, %cst_23 {dimension_numbers = #tpu.dot_dimension_numbers<[1], [0], [0], [1], [0, 0, 1, 1], [], []>} : vector<8x32xf32>, vector<32x96xf32>, vector<8x96xf32> -> vector<8x96xf32>
    %80 = vector.extract_strided_slice %78 {offsets = [0, 0], sizes = [8, 64], strides = [1, 1]} : vector<8x96xf32> to vector<8x64xf32>
    %81 = vector.extract_strided_slice %79 {offsets = [0, 0], sizes = [8, 64], strides = [1, 1]} : vector<8x96xf32> to vector<8x64xf32>
    %82 = arith.addf %80, %81 : vector<8x64xf32>
    %83 = arith.negf %82 : vector<8x64xf32>
    %84 = math.exp %83 : vector<8x64xf32>
    %cst_24 = arith.constant 1.000000e+00 : f32
    %85 = vector.broadcast %cst_24 : f32 to vector<8x64xf32>
    %86 = arith.addf %85, %84 : vector<8x64xf32>
    %87 = arith.divf %85, %86 : vector<8x64xf32>
    %88 = vector.extract_strided_slice %87 {offsets = [0, 0], sizes = [8, 32], strides = [1, 1]} : vector<8x64xf32> to vector<8x32xf32>
    %89 = vector.extract_strided_slice %87 {offsets = [0, 32], sizes = [8, 32], strides = [1, 1]} : vector<8x64xf32> to vector<8x32xf32>
    %90 = vector.extract_strided_slice %78 {offsets = [0, 64], sizes = [8, 32], strides = [1, 1]} : vector<8x96xf32> to vector<8x32xf32>
    %91 = vector.extract_strided_slice %79 {offsets = [0, 64], sizes = [8, 32], strides = [1, 1]} : vector<8x96xf32> to vector<8x32xf32>
    %92 = vector.broadcast %5 : vector<1x32xf32> to vector<8x32xf32>
    %93 = arith.addf %91, %92 : vector<8x32xf32>
    %94 = arith.mulf %88, %93 : vector<8x32xf32>
    %95 = arith.addf %90, %94 : vector<8x32xf32>
    %96 = math.tanh %95 : vector<8x32xf32>
    %cst_25 = arith.constant 1.000000e+00 : f32
    %97 = vector.broadcast %cst_25 : f32 to vector<8x32xf32>
    %98 = arith.subf %97, %89 : vector<8x32xf32>
    %99 = arith.mulf %98, %96 : vector<8x32xf32>
    %100 = arith.mulf %89, %43 : vector<8x32xf32>
    %101 = arith.addf %99, %100 : vector<8x32xf32>
    %cst_26 = arith.constant dense<0.000000e+00> : vector<8x16xf32>
    %102 = tpu.matmul %101, %2, %cst_26 {dimension_numbers = #tpu.dot_dimension_numbers<[1], [0], [0], [1], [0, 0, 1, 1], [], []>} : vector<8x32xf32>, vector<32x16xf32>, vector<8x16xf32> -> vector<8x16xf32>
    %103 = vector.broadcast %6 : vector<1x16xf32> to vector<8x16xf32>
    %104 = arith.addf %102, %103 : vector<8x16xf32>
    %105 = math.tanh %104 : vector<8x16xf32>
    %cst_27 = arith.constant dense<0.000000e+00> : vector<8x96xf32>
    %106 = tpu.matmul %105, %7, %cst_27 {dimension_numbers = #tpu.dot_dimension_numbers<[1], [0], [0], [1], [0, 0, 1, 1], [], []>} : vector<8x16xf32>, vector<16x96xf32>, vector<8x96xf32> -> vector<8x96xf32>
    %107 = vector.broadcast %11 : vector<1x96xf32> to vector<8x96xf32>
    %108 = arith.addf %106, %107 : vector<8x96xf32>
    %cst_28 = arith.constant dense<0.000000e+00> : vector<8x96xf32>
    %109 = tpu.matmul %73, %8, %cst_28 {dimension_numbers = #tpu.dot_dimension_numbers<[1], [0], [0], [1], [0, 0, 1, 1], [], []>} : vector<8x32xf32>, vector<32x96xf32>, vector<8x96xf32> -> vector<8x96xf32>
    %110 = vector.extract_strided_slice %108 {offsets = [0, 0], sizes = [8, 64], strides = [1, 1]} : vector<8x96xf32> to vector<8x64xf32>
    %111 = vector.extract_strided_slice %109 {offsets = [0, 0], sizes = [8, 64], strides = [1, 1]} : vector<8x96xf32> to vector<8x64xf32>
    %112 = arith.addf %110, %111 : vector<8x64xf32>
    %113 = arith.negf %112 : vector<8x64xf32>
    %114 = math.exp %113 : vector<8x64xf32>
    %cst_29 = arith.constant 1.000000e+00 : f32
    %115 = vector.broadcast %cst_29 : f32 to vector<8x64xf32>
    %116 = arith.addf %115, %114 : vector<8x64xf32>
    %117 = arith.divf %115, %116 : vector<8x64xf32>
    %118 = vector.extract_strided_slice %117 {offsets = [0, 0], sizes = [8, 32], strides = [1, 1]} : vector<8x64xf32> to vector<8x32xf32>
    %119 = vector.extract_strided_slice %117 {offsets = [0, 32], sizes = [8, 32], strides = [1, 1]} : vector<8x64xf32> to vector<8x32xf32>
    %120 = vector.extract_strided_slice %108 {offsets = [0, 64], sizes = [8, 32], strides = [1, 1]} : vector<8x96xf32> to vector<8x32xf32>
    %121 = vector.extract_strided_slice %109 {offsets = [0, 64], sizes = [8, 32], strides = [1, 1]} : vector<8x96xf32> to vector<8x32xf32>
    %122 = vector.broadcast %12 : vector<1x32xf32> to vector<8x32xf32>
    %123 = arith.addf %121, %122 : vector<8x32xf32>
    %124 = arith.mulf %118, %123 : vector<8x32xf32>
    %125 = arith.addf %120, %124 : vector<8x32xf32>
    %126 = math.tanh %125 : vector<8x32xf32>
    %cst_30 = arith.constant 1.000000e+00 : f32
    %127 = vector.broadcast %cst_30 : f32 to vector<8x32xf32>
    %128 = arith.subf %127, %119 : vector<8x32xf32>
    %129 = arith.mulf %128, %126 : vector<8x32xf32>
    %130 = arith.mulf %119, %73 : vector<8x32xf32>
    %131 = arith.addf %129, %130 : vector<8x32xf32>
    %cst_31 = arith.constant dense<0.000000e+00> : vector<8x16xf32>
    %132 = tpu.matmul %131, %9, %cst_31 {dimension_numbers = #tpu.dot_dimension_numbers<[1], [0], [0], [1], [0, 0, 1, 1], [], []>} : vector<8x32xf32>, vector<32x16xf32>, vector<8x16xf32> -> vector<8x16xf32>
    %133 = vector.broadcast %13 : vector<1x16xf32> to vector<8x16xf32>
    %134 = arith.addf %132, %133 : vector<8x16xf32>
    %135 = math.tanh %134 : vector<8x16xf32>
    %136 = vector.extract_strided_slice %17 {offsets = [16, 0], sizes = [8, 96], strides = [1, 1]} : vector<64x96xf32> to vector<8x96xf32>
    %cst_32 = arith.constant dense<0.000000e+00> : vector<8x96xf32>
    %137 = tpu.matmul %101, %1, %cst_32 {dimension_numbers = #tpu.dot_dimension_numbers<[1], [0], [0], [1], [0, 0, 1, 1], [], []>} : vector<8x32xf32>, vector<32x96xf32>, vector<8x96xf32> -> vector<8x96xf32>
    %138 = vector.extract_strided_slice %136 {offsets = [0, 0], sizes = [8, 64], strides = [1, 1]} : vector<8x96xf32> to vector<8x64xf32>
    %139 = vector.extract_strided_slice %137 {offsets = [0, 0], sizes = [8, 64], strides = [1, 1]} : vector<8x96xf32> to vector<8x64xf32>
    %140 = arith.addf %138, %139 : vector<8x64xf32>
    %141 = arith.negf %140 : vector<8x64xf32>
    %142 = math.exp %141 : vector<8x64xf32>
    %cst_33 = arith.constant 1.000000e+00 : f32
    %143 = vector.broadcast %cst_33 : f32 to vector<8x64xf32>
    %144 = arith.addf %143, %142 : vector<8x64xf32>
    %145 = arith.divf %143, %144 : vector<8x64xf32>
    %146 = vector.extract_strided_slice %145 {offsets = [0, 0], sizes = [8, 32], strides = [1, 1]} : vector<8x64xf32> to vector<8x32xf32>
    %147 = vector.extract_strided_slice %145 {offsets = [0, 32], sizes = [8, 32], strides = [1, 1]} : vector<8x64xf32> to vector<8x32xf32>
    %148 = vector.extract_strided_slice %136 {offsets = [0, 64], sizes = [8, 32], strides = [1, 1]} : vector<8x96xf32> to vector<8x32xf32>
    %149 = vector.extract_strided_slice %137 {offsets = [0, 64], sizes = [8, 32], strides = [1, 1]} : vector<8x96xf32> to vector<8x32xf32>
    %150 = vector.broadcast %5 : vector<1x32xf32> to vector<8x32xf32>
    %151 = arith.addf %149, %150 : vector<8x32xf32>
    %152 = arith.mulf %146, %151 : vector<8x32xf32>
    %153 = arith.addf %148, %152 : vector<8x32xf32>
    %154 = math.tanh %153 : vector<8x32xf32>
    %cst_34 = arith.constant 1.000000e+00 : f32
    %155 = vector.broadcast %cst_34 : f32 to vector<8x32xf32>
    %156 = arith.subf %155, %147 : vector<8x32xf32>
    %157 = arith.mulf %156, %154 : vector<8x32xf32>
    %158 = arith.mulf %147, %101 : vector<8x32xf32>
    %159 = arith.addf %157, %158 : vector<8x32xf32>
    %cst_35 = arith.constant dense<0.000000e+00> : vector<8x16xf32>
    %160 = tpu.matmul %159, %2, %cst_35 {dimension_numbers = #tpu.dot_dimension_numbers<[1], [0], [0], [1], [0, 0, 1, 1], [], []>} : vector<8x32xf32>, vector<32x16xf32>, vector<8x16xf32> -> vector<8x16xf32>
    %161 = vector.broadcast %6 : vector<1x16xf32> to vector<8x16xf32>
    %162 = arith.addf %160, %161 : vector<8x16xf32>
    %163 = math.tanh %162 : vector<8x16xf32>
    %cst_36 = arith.constant dense<0.000000e+00> : vector<8x96xf32>
    %164 = tpu.matmul %163, %7, %cst_36 {dimension_numbers = #tpu.dot_dimension_numbers<[1], [0], [0], [1], [0, 0, 1, 1], [], []>} : vector<8x16xf32>, vector<16x96xf32>, vector<8x96xf32> -> vector<8x96xf32>
    %165 = vector.broadcast %11 : vector<1x96xf32> to vector<8x96xf32>
    %166 = arith.addf %164, %165 : vector<8x96xf32>
    %cst_37 = arith.constant dense<0.000000e+00> : vector<8x96xf32>
    %167 = tpu.matmul %131, %8, %cst_37 {dimension_numbers = #tpu.dot_dimension_numbers<[1], [0], [0], [1], [0, 0, 1, 1], [], []>} : vector<8x32xf32>, vector<32x96xf32>, vector<8x96xf32> -> vector<8x96xf32>
    %168 = vector.extract_strided_slice %166 {offsets = [0, 0], sizes = [8, 64], strides = [1, 1]} : vector<8x96xf32> to vector<8x64xf32>
    %169 = vector.extract_strided_slice %167 {offsets = [0, 0], sizes = [8, 64], strides = [1, 1]} : vector<8x96xf32> to vector<8x64xf32>
    %170 = arith.addf %168, %169 : vector<8x64xf32>
    %171 = arith.negf %170 : vector<8x64xf32>
    %172 = math.exp %171 : vector<8x64xf32>
    %cst_38 = arith.constant 1.000000e+00 : f32
    %173 = vector.broadcast %cst_38 : f32 to vector<8x64xf32>
    %174 = arith.addf %173, %172 : vector<8x64xf32>
    %175 = arith.divf %173, %174 : vector<8x64xf32>
    %176 = vector.extract_strided_slice %175 {offsets = [0, 0], sizes = [8, 32], strides = [1, 1]} : vector<8x64xf32> to vector<8x32xf32>
    %177 = vector.extract_strided_slice %175 {offsets = [0, 32], sizes = [8, 32], strides = [1, 1]} : vector<8x64xf32> to vector<8x32xf32>
    %178 = vector.extract_strided_slice %166 {offsets = [0, 64], sizes = [8, 32], strides = [1, 1]} : vector<8x96xf32> to vector<8x32xf32>
    %179 = vector.extract_strided_slice %167 {offsets = [0, 64], sizes = [8, 32], strides = [1, 1]} : vector<8x96xf32> to vector<8x32xf32>
    %180 = vector.broadcast %12 : vector<1x32xf32> to vector<8x32xf32>
    %181 = arith.addf %179, %180 : vector<8x32xf32>
    %182 = arith.mulf %176, %181 : vector<8x32xf32>
    %183 = arith.addf %178, %182 : vector<8x32xf32>
    %184 = math.tanh %183 : vector<8x32xf32>
    %cst_39 = arith.constant 1.000000e+00 : f32
    %185 = vector.broadcast %cst_39 : f32 to vector<8x32xf32>
    %186 = arith.subf %185, %177 : vector<8x32xf32>
    %187 = arith.mulf %186, %184 : vector<8x32xf32>
    %188 = arith.mulf %177, %131 : vector<8x32xf32>
    %189 = arith.addf %187, %188 : vector<8x32xf32>
    %cst_40 = arith.constant dense<0.000000e+00> : vector<8x16xf32>
    %190 = tpu.matmul %189, %9, %cst_40 {dimension_numbers = #tpu.dot_dimension_numbers<[1], [0], [0], [1], [0, 0, 1, 1], [], []>} : vector<8x32xf32>, vector<32x16xf32>, vector<8x16xf32> -> vector<8x16xf32>
    %191 = vector.broadcast %13 : vector<1x16xf32> to vector<8x16xf32>
    %192 = arith.addf %190, %191 : vector<8x16xf32>
    %193 = math.tanh %192 : vector<8x16xf32>
    %194 = vector.extract_strided_slice %17 {offsets = [24, 0], sizes = [8, 96], strides = [1, 1]} : vector<64x96xf32> to vector<8x96xf32>
    %cst_41 = arith.constant dense<0.000000e+00> : vector<8x96xf32>
    %195 = tpu.matmul %159, %1, %cst_41 {dimension_numbers = #tpu.dot_dimension_numbers<[1], [0], [0], [1], [0, 0, 1, 1], [], []>} : vector<8x32xf32>, vector<32x96xf32>, vector<8x96xf32> -> vector<8x96xf32>
    %196 = vector.extract_strided_slice %194 {offsets = [0, 0], sizes = [8, 64], strides = [1, 1]} : vector<8x96xf32> to vector<8x64xf32>
    %197 = vector.extract_strided_slice %195 {offsets = [0, 0], sizes = [8, 64], strides = [1, 1]} : vector<8x96xf32> to vector<8x64xf32>
    %198 = arith.addf %196, %197 : vector<8x64xf32>
    %199 = arith.negf %198 : vector<8x64xf32>
    %200 = math.exp %199 : vector<8x64xf32>
    %cst_42 = arith.constant 1.000000e+00 : f32
    %201 = vector.broadcast %cst_42 : f32 to vector<8x64xf32>
    %202 = arith.addf %201, %200 : vector<8x64xf32>
    %203 = arith.divf %201, %202 : vector<8x64xf32>
    %204 = vector.extract_strided_slice %203 {offsets = [0, 0], sizes = [8, 32], strides = [1, 1]} : vector<8x64xf32> to vector<8x32xf32>
    %205 = vector.extract_strided_slice %203 {offsets = [0, 32], sizes = [8, 32], strides = [1, 1]} : vector<8x64xf32> to vector<8x32xf32>
    %206 = vector.extract_strided_slice %194 {offsets = [0, 64], sizes = [8, 32], strides = [1, 1]} : vector<8x96xf32> to vector<8x32xf32>
    %207 = vector.extract_strided_slice %195 {offsets = [0, 64], sizes = [8, 32], strides = [1, 1]} : vector<8x96xf32> to vector<8x32xf32>
    %208 = vector.broadcast %5 : vector<1x32xf32> to vector<8x32xf32>
    %209 = arith.addf %207, %208 : vector<8x32xf32>
    %210 = arith.mulf %204, %209 : vector<8x32xf32>
    %211 = arith.addf %206, %210 : vector<8x32xf32>
    %212 = math.tanh %211 : vector<8x32xf32>
    %cst_43 = arith.constant 1.000000e+00 : f32
    %213 = vector.broadcast %cst_43 : f32 to vector<8x32xf32>
    %214 = arith.subf %213, %205 : vector<8x32xf32>
    %215 = arith.mulf %214, %212 : vector<8x32xf32>
    %216 = arith.mulf %205, %159 : vector<8x32xf32>
    %217 = arith.addf %215, %216 : vector<8x32xf32>
    %cst_44 = arith.constant dense<0.000000e+00> : vector<8x16xf32>
    %218 = tpu.matmul %217, %2, %cst_44 {dimension_numbers = #tpu.dot_dimension_numbers<[1], [0], [0], [1], [0, 0, 1, 1], [], []>} : vector<8x32xf32>, vector<32x16xf32>, vector<8x16xf32> -> vector<8x16xf32>
    %219 = vector.broadcast %6 : vector<1x16xf32> to vector<8x16xf32>
    %220 = arith.addf %218, %219 : vector<8x16xf32>
    %221 = math.tanh %220 : vector<8x16xf32>
    %cst_45 = arith.constant dense<0.000000e+00> : vector<8x96xf32>
    %222 = tpu.matmul %221, %7, %cst_45 {dimension_numbers = #tpu.dot_dimension_numbers<[1], [0], [0], [1], [0, 0, 1, 1], [], []>} : vector<8x16xf32>, vector<16x96xf32>, vector<8x96xf32> -> vector<8x96xf32>
    %223 = vector.broadcast %11 : vector<1x96xf32> to vector<8x96xf32>
    %224 = arith.addf %222, %223 : vector<8x96xf32>
    %cst_46 = arith.constant dense<0.000000e+00> : vector<8x96xf32>
    %225 = tpu.matmul %189, %8, %cst_46 {dimension_numbers = #tpu.dot_dimension_numbers<[1], [0], [0], [1], [0, 0, 1, 1], [], []>} : vector<8x32xf32>, vector<32x96xf32>, vector<8x96xf32> -> vector<8x96xf32>
    %226 = vector.extract_strided_slice %224 {offsets = [0, 0], sizes = [8, 64], strides = [1, 1]} : vector<8x96xf32> to vector<8x64xf32>
    %227 = vector.extract_strided_slice %225 {offsets = [0, 0], sizes = [8, 64], strides = [1, 1]} : vector<8x96xf32> to vector<8x64xf32>
    %228 = arith.addf %226, %227 : vector<8x64xf32>
    %229 = arith.negf %228 : vector<8x64xf32>
    %230 = math.exp %229 : vector<8x64xf32>
    %cst_47 = arith.constant 1.000000e+00 : f32
    %231 = vector.broadcast %cst_47 : f32 to vector<8x64xf32>
    %232 = arith.addf %231, %230 : vector<8x64xf32>
    %233 = arith.divf %231, %232 : vector<8x64xf32>
    %234 = vector.extract_strided_slice %233 {offsets = [0, 0], sizes = [8, 32], strides = [1, 1]} : vector<8x64xf32> to vector<8x32xf32>
    %235 = vector.extract_strided_slice %233 {offsets = [0, 32], sizes = [8, 32], strides = [1, 1]} : vector<8x64xf32> to vector<8x32xf32>
    %236 = vector.extract_strided_slice %224 {offsets = [0, 64], sizes = [8, 32], strides = [1, 1]} : vector<8x96xf32> to vector<8x32xf32>
    %237 = vector.extract_strided_slice %225 {offsets = [0, 64], sizes = [8, 32], strides = [1, 1]} : vector<8x96xf32> to vector<8x32xf32>
    %238 = vector.broadcast %12 : vector<1x32xf32> to vector<8x32xf32>
    %239 = arith.addf %237, %238 : vector<8x32xf32>
    %240 = arith.mulf %234, %239 : vector<8x32xf32>
    %241 = arith.addf %236, %240 : vector<8x32xf32>
    %242 = math.tanh %241 : vector<8x32xf32>
    %cst_48 = arith.constant 1.000000e+00 : f32
    %243 = vector.broadcast %cst_48 : f32 to vector<8x32xf32>
    %244 = arith.subf %243, %235 : vector<8x32xf32>
    %245 = arith.mulf %244, %242 : vector<8x32xf32>
    %246 = arith.mulf %235, %189 : vector<8x32xf32>
    %247 = arith.addf %245, %246 : vector<8x32xf32>
    %cst_49 = arith.constant dense<0.000000e+00> : vector<8x16xf32>
    %248 = tpu.matmul %247, %9, %cst_49 {dimension_numbers = #tpu.dot_dimension_numbers<[1], [0], [0], [1], [0, 0, 1, 1], [], []>} : vector<8x32xf32>, vector<32x16xf32>, vector<8x16xf32> -> vector<8x16xf32>
    %249 = vector.broadcast %13 : vector<1x16xf32> to vector<8x16xf32>
    %250 = arith.addf %248, %249 : vector<8x16xf32>
    %251 = math.tanh %250 : vector<8x16xf32>
    %252 = vector.extract_strided_slice %17 {offsets = [32, 0], sizes = [8, 96], strides = [1, 1]} : vector<64x96xf32> to vector<8x96xf32>
    %cst_50 = arith.constant dense<0.000000e+00> : vector<8x96xf32>
    %253 = tpu.matmul %217, %1, %cst_50 {dimension_numbers = #tpu.dot_dimension_numbers<[1], [0], [0], [1], [0, 0, 1, 1], [], []>} : vector<8x32xf32>, vector<32x96xf32>, vector<8x96xf32> -> vector<8x96xf32>
    %254 = vector.extract_strided_slice %252 {offsets = [0, 0], sizes = [8, 64], strides = [1, 1]} : vector<8x96xf32> to vector<8x64xf32>
    %255 = vector.extract_strided_slice %253 {offsets = [0, 0], sizes = [8, 64], strides = [1, 1]} : vector<8x96xf32> to vector<8x64xf32>
    %256 = arith.addf %254, %255 : vector<8x64xf32>
    %257 = arith.negf %256 : vector<8x64xf32>
    %258 = math.exp %257 : vector<8x64xf32>
    %cst_51 = arith.constant 1.000000e+00 : f32
    %259 = vector.broadcast %cst_51 : f32 to vector<8x64xf32>
    %260 = arith.addf %259, %258 : vector<8x64xf32>
    %261 = arith.divf %259, %260 : vector<8x64xf32>
    %262 = vector.extract_strided_slice %261 {offsets = [0, 0], sizes = [8, 32], strides = [1, 1]} : vector<8x64xf32> to vector<8x32xf32>
    %263 = vector.extract_strided_slice %261 {offsets = [0, 32], sizes = [8, 32], strides = [1, 1]} : vector<8x64xf32> to vector<8x32xf32>
    %264 = vector.extract_strided_slice %252 {offsets = [0, 64], sizes = [8, 32], strides = [1, 1]} : vector<8x96xf32> to vector<8x32xf32>
    %265 = vector.extract_strided_slice %253 {offsets = [0, 64], sizes = [8, 32], strides = [1, 1]} : vector<8x96xf32> to vector<8x32xf32>
    %266 = vector.broadcast %5 : vector<1x32xf32> to vector<8x32xf32>
    %267 = arith.addf %265, %266 : vector<8x32xf32>
    %268 = arith.mulf %262, %267 : vector<8x32xf32>
    %269 = arith.addf %264, %268 : vector<8x32xf32>
    %270 = math.tanh %269 : vector<8x32xf32>
    %cst_52 = arith.constant 1.000000e+00 : f32
    %271 = vector.broadcast %cst_52 : f32 to vector<8x32xf32>
    %272 = arith.subf %271, %263 : vector<8x32xf32>
    %273 = arith.mulf %272, %270 : vector<8x32xf32>
    %274 = arith.mulf %263, %217 : vector<8x32xf32>
    %275 = arith.addf %273, %274 : vector<8x32xf32>
    %cst_53 = arith.constant dense<0.000000e+00> : vector<8x16xf32>
    %276 = tpu.matmul %275, %2, %cst_53 {dimension_numbers = #tpu.dot_dimension_numbers<[1], [0], [0], [1], [0, 0, 1, 1], [], []>} : vector<8x32xf32>, vector<32x16xf32>, vector<8x16xf32> -> vector<8x16xf32>
    %277 = vector.broadcast %6 : vector<1x16xf32> to vector<8x16xf32>
    %278 = arith.addf %276, %277 : vector<8x16xf32>
    %279 = math.tanh %278 : vector<8x16xf32>
    %cst_54 = arith.constant dense<0.000000e+00> : vector<8x96xf32>
    %280 = tpu.matmul %279, %7, %cst_54 {dimension_numbers = #tpu.dot_dimension_numbers<[1], [0], [0], [1], [0, 0, 1, 1], [], []>} : vector<8x16xf32>, vector<16x96xf32>, vector<8x96xf32> -> vector<8x96xf32>
    %281 = vector.broadcast %11 : vector<1x96xf32> to vector<8x96xf32>
    %282 = arith.addf %280, %281 : vector<8x96xf32>
    %cst_55 = arith.constant dense<0.000000e+00> : vector<8x96xf32>
    %283 = tpu.matmul %247, %8, %cst_55 {dimension_numbers = #tpu.dot_dimension_numbers<[1], [0], [0], [1], [0, 0, 1, 1], [], []>} : vector<8x32xf32>, vector<32x96xf32>, vector<8x96xf32> -> vector<8x96xf32>
    %284 = vector.extract_strided_slice %282 {offsets = [0, 0], sizes = [8, 64], strides = [1, 1]} : vector<8x96xf32> to vector<8x64xf32>
    %285 = vector.extract_strided_slice %283 {offsets = [0, 0], sizes = [8, 64], strides = [1, 1]} : vector<8x96xf32> to vector<8x64xf32>
    %286 = arith.addf %284, %285 : vector<8x64xf32>
    %287 = arith.negf %286 : vector<8x64xf32>
    %288 = math.exp %287 : vector<8x64xf32>
    %cst_56 = arith.constant 1.000000e+00 : f32
    %289 = vector.broadcast %cst_56 : f32 to vector<8x64xf32>
    %290 = arith.addf %289, %288 : vector<8x64xf32>
    %291 = arith.divf %289, %290 : vector<8x64xf32>
    %292 = vector.extract_strided_slice %291 {offsets = [0, 0], sizes = [8, 32], strides = [1, 1]} : vector<8x64xf32> to vector<8x32xf32>
    %293 = vector.extract_strided_slice %291 {offsets = [0, 32], sizes = [8, 32], strides = [1, 1]} : vector<8x64xf32> to vector<8x32xf32>
    %294 = vector.extract_strided_slice %282 {offsets = [0, 64], sizes = [8, 32], strides = [1, 1]} : vector<8x96xf32> to vector<8x32xf32>
    %295 = vector.extract_strided_slice %283 {offsets = [0, 64], sizes = [8, 32], strides = [1, 1]} : vector<8x96xf32> to vector<8x32xf32>
    %296 = vector.broadcast %12 : vector<1x32xf32> to vector<8x32xf32>
    %297 = arith.addf %295, %296 : vector<8x32xf32>
    %298 = arith.mulf %292, %297 : vector<8x32xf32>
    %299 = arith.addf %294, %298 : vector<8x32xf32>
    %300 = math.tanh %299 : vector<8x32xf32>
    %cst_57 = arith.constant 1.000000e+00 : f32
    %301 = vector.broadcast %cst_57 : f32 to vector<8x32xf32>
    %302 = arith.subf %301, %293 : vector<8x32xf32>
    %303 = arith.mulf %302, %300 : vector<8x32xf32>
    %304 = arith.mulf %293, %247 : vector<8x32xf32>
    %305 = arith.addf %303, %304 : vector<8x32xf32>
    %cst_58 = arith.constant dense<0.000000e+00> : vector<8x16xf32>
    %306 = tpu.matmul %305, %9, %cst_58 {dimension_numbers = #tpu.dot_dimension_numbers<[1], [0], [0], [1], [0, 0, 1, 1], [], []>} : vector<8x32xf32>, vector<32x16xf32>, vector<8x16xf32> -> vector<8x16xf32>
    %307 = vector.broadcast %13 : vector<1x16xf32> to vector<8x16xf32>
    %308 = arith.addf %306, %307 : vector<8x16xf32>
    %309 = math.tanh %308 : vector<8x16xf32>
    %310 = vector.extract_strided_slice %17 {offsets = [40, 0], sizes = [8, 96], strides = [1, 1]} : vector<64x96xf32> to vector<8x96xf32>
    %cst_59 = arith.constant dense<0.000000e+00> : vector<8x96xf32>
    %311 = tpu.matmul %275, %1, %cst_59 {dimension_numbers = #tpu.dot_dimension_numbers<[1], [0], [0], [1], [0, 0, 1, 1], [], []>} : vector<8x32xf32>, vector<32x96xf32>, vector<8x96xf32> -> vector<8x96xf32>
    %312 = vector.extract_strided_slice %310 {offsets = [0, 0], sizes = [8, 64], strides = [1, 1]} : vector<8x96xf32> to vector<8x64xf32>
    %313 = vector.extract_strided_slice %311 {offsets = [0, 0], sizes = [8, 64], strides = [1, 1]} : vector<8x96xf32> to vector<8x64xf32>
    %314 = arith.addf %312, %313 : vector<8x64xf32>
    %315 = arith.negf %314 : vector<8x64xf32>
    %316 = math.exp %315 : vector<8x64xf32>
    %cst_60 = arith.constant 1.000000e+00 : f32
    %317 = vector.broadcast %cst_60 : f32 to vector<8x64xf32>
    %318 = arith.addf %317, %316 : vector<8x64xf32>
    %319 = arith.divf %317, %318 : vector<8x64xf32>
    %320 = vector.extract_strided_slice %319 {offsets = [0, 0], sizes = [8, 32], strides = [1, 1]} : vector<8x64xf32> to vector<8x32xf32>
    %321 = vector.extract_strided_slice %319 {offsets = [0, 32], sizes = [8, 32], strides = [1, 1]} : vector<8x64xf32> to vector<8x32xf32>
    %322 = vector.extract_strided_slice %310 {offsets = [0, 64], sizes = [8, 32], strides = [1, 1]} : vector<8x96xf32> to vector<8x32xf32>
    %323 = vector.extract_strided_slice %311 {offsets = [0, 64], sizes = [8, 32], strides = [1, 1]} : vector<8x96xf32> to vector<8x32xf32>
    %324 = vector.broadcast %5 : vector<1x32xf32> to vector<8x32xf32>
    %325 = arith.addf %323, %324 : vector<8x32xf32>
    %326 = arith.mulf %320, %325 : vector<8x32xf32>
    %327 = arith.addf %322, %326 : vector<8x32xf32>
    %328 = math.tanh %327 : vector<8x32xf32>
    %cst_61 = arith.constant 1.000000e+00 : f32
    %329 = vector.broadcast %cst_61 : f32 to vector<8x32xf32>
    %330 = arith.subf %329, %321 : vector<8x32xf32>
    %331 = arith.mulf %330, %328 : vector<8x32xf32>
    %332 = arith.mulf %321, %275 : vector<8x32xf32>
    %333 = arith.addf %331, %332 : vector<8x32xf32>
    %cst_62 = arith.constant dense<0.000000e+00> : vector<8x16xf32>
    %334 = tpu.matmul %333, %2, %cst_62 {dimension_numbers = #tpu.dot_dimension_numbers<[1], [0], [0], [1], [0, 0, 1, 1], [], []>} : vector<8x32xf32>, vector<32x16xf32>, vector<8x16xf32> -> vector<8x16xf32>
    %335 = vector.broadcast %6 : vector<1x16xf32> to vector<8x16xf32>
    %336 = arith.addf %334, %335 : vector<8x16xf32>
    %337 = math.tanh %336 : vector<8x16xf32>
    %cst_63 = arith.constant dense<0.000000e+00> : vector<8x96xf32>
    %338 = tpu.matmul %337, %7, %cst_63 {dimension_numbers = #tpu.dot_dimension_numbers<[1], [0], [0], [1], [0, 0, 1, 1], [], []>} : vector<8x16xf32>, vector<16x96xf32>, vector<8x96xf32> -> vector<8x96xf32>
    %339 = vector.broadcast %11 : vector<1x96xf32> to vector<8x96xf32>
    %340 = arith.addf %338, %339 : vector<8x96xf32>
    %cst_64 = arith.constant dense<0.000000e+00> : vector<8x96xf32>
    %341 = tpu.matmul %305, %8, %cst_64 {dimension_numbers = #tpu.dot_dimension_numbers<[1], [0], [0], [1], [0, 0, 1, 1], [], []>} : vector<8x32xf32>, vector<32x96xf32>, vector<8x96xf32> -> vector<8x96xf32>
    %342 = vector.extract_strided_slice %340 {offsets = [0, 0], sizes = [8, 64], strides = [1, 1]} : vector<8x96xf32> to vector<8x64xf32>
    %343 = vector.extract_strided_slice %341 {offsets = [0, 0], sizes = [8, 64], strides = [1, 1]} : vector<8x96xf32> to vector<8x64xf32>
    %344 = arith.addf %342, %343 : vector<8x64xf32>
    %345 = arith.negf %344 : vector<8x64xf32>
    %346 = math.exp %345 : vector<8x64xf32>
    %cst_65 = arith.constant 1.000000e+00 : f32
    %347 = vector.broadcast %cst_65 : f32 to vector<8x64xf32>
    %348 = arith.addf %347, %346 : vector<8x64xf32>
    %349 = arith.divf %347, %348 : vector<8x64xf32>
    %350 = vector.extract_strided_slice %349 {offsets = [0, 0], sizes = [8, 32], strides = [1, 1]} : vector<8x64xf32> to vector<8x32xf32>
    %351 = vector.extract_strided_slice %349 {offsets = [0, 32], sizes = [8, 32], strides = [1, 1]} : vector<8x64xf32> to vector<8x32xf32>
    %352 = vector.extract_strided_slice %340 {offsets = [0, 64], sizes = [8, 32], strides = [1, 1]} : vector<8x96xf32> to vector<8x32xf32>
    %353 = vector.extract_strided_slice %341 {offsets = [0, 64], sizes = [8, 32], strides = [1, 1]} : vector<8x96xf32> to vector<8x32xf32>
    %354 = vector.broadcast %12 : vector<1x32xf32> to vector<8x32xf32>
    %355 = arith.addf %353, %354 : vector<8x32xf32>
    %356 = arith.mulf %350, %355 : vector<8x32xf32>
    %357 = arith.addf %352, %356 : vector<8x32xf32>
    %358 = math.tanh %357 : vector<8x32xf32>
    %cst_66 = arith.constant 1.000000e+00 : f32
    %359 = vector.broadcast %cst_66 : f32 to vector<8x32xf32>
    %360 = arith.subf %359, %351 : vector<8x32xf32>
    %361 = arith.mulf %360, %358 : vector<8x32xf32>
    %362 = arith.mulf %351, %305 : vector<8x32xf32>
    %363 = arith.addf %361, %362 : vector<8x32xf32>
    %cst_67 = arith.constant dense<0.000000e+00> : vector<8x16xf32>
    %364 = tpu.matmul %363, %9, %cst_67 {dimension_numbers = #tpu.dot_dimension_numbers<[1], [0], [0], [1], [0, 0, 1, 1], [], []>} : vector<8x32xf32>, vector<32x16xf32>, vector<8x16xf32> -> vector<8x16xf32>
    %365 = vector.broadcast %13 : vector<1x16xf32> to vector<8x16xf32>
    %366 = arith.addf %364, %365 : vector<8x16xf32>
    %367 = math.tanh %366 : vector<8x16xf32>
    %368 = vector.extract_strided_slice %17 {offsets = [48, 0], sizes = [8, 96], strides = [1, 1]} : vector<64x96xf32> to vector<8x96xf32>
    %cst_68 = arith.constant dense<0.000000e+00> : vector<8x96xf32>
    %369 = tpu.matmul %333, %1, %cst_68 {dimension_numbers = #tpu.dot_dimension_numbers<[1], [0], [0], [1], [0, 0, 1, 1], [], []>} : vector<8x32xf32>, vector<32x96xf32>, vector<8x96xf32> -> vector<8x96xf32>
    %370 = vector.extract_strided_slice %368 {offsets = [0, 0], sizes = [8, 64], strides = [1, 1]} : vector<8x96xf32> to vector<8x64xf32>
    %371 = vector.extract_strided_slice %369 {offsets = [0, 0], sizes = [8, 64], strides = [1, 1]} : vector<8x96xf32> to vector<8x64xf32>
    %372 = arith.addf %370, %371 : vector<8x64xf32>
    %373 = arith.negf %372 : vector<8x64xf32>
    %374 = math.exp %373 : vector<8x64xf32>
    %cst_69 = arith.constant 1.000000e+00 : f32
    %375 = vector.broadcast %cst_69 : f32 to vector<8x64xf32>
    %376 = arith.addf %375, %374 : vector<8x64xf32>
    %377 = arith.divf %375, %376 : vector<8x64xf32>
    %378 = vector.extract_strided_slice %377 {offsets = [0, 0], sizes = [8, 32], strides = [1, 1]} : vector<8x64xf32> to vector<8x32xf32>
    %379 = vector.extract_strided_slice %377 {offsets = [0, 32], sizes = [8, 32], strides = [1, 1]} : vector<8x64xf32> to vector<8x32xf32>
    %380 = vector.extract_strided_slice %368 {offsets = [0, 64], sizes = [8, 32], strides = [1, 1]} : vector<8x96xf32> to vector<8x32xf32>
    %381 = vector.extract_strided_slice %369 {offsets = [0, 64], sizes = [8, 32], strides = [1, 1]} : vector<8x96xf32> to vector<8x32xf32>
    %382 = vector.broadcast %5 : vector<1x32xf32> to vector<8x32xf32>
    %383 = arith.addf %381, %382 : vector<8x32xf32>
    %384 = arith.mulf %378, %383 : vector<8x32xf32>
    %385 = arith.addf %380, %384 : vector<8x32xf32>
    %386 = math.tanh %385 : vector<8x32xf32>
    %cst_70 = arith.constant 1.000000e+00 : f32
    %387 = vector.broadcast %cst_70 : f32 to vector<8x32xf32>
    %388 = arith.subf %387, %379 : vector<8x32xf32>
    %389 = arith.mulf %388, %386 : vector<8x32xf32>
    %390 = arith.mulf %379, %333 : vector<8x32xf32>
    %391 = arith.addf %389, %390 : vector<8x32xf32>
    %cst_71 = arith.constant dense<0.000000e+00> : vector<8x16xf32>
    %392 = tpu.matmul %391, %2, %cst_71 {dimension_numbers = #tpu.dot_dimension_numbers<[1], [0], [0], [1], [0, 0, 1, 1], [], []>} : vector<8x32xf32>, vector<32x16xf32>, vector<8x16xf32> -> vector<8x16xf32>
    %393 = vector.broadcast %6 : vector<1x16xf32> to vector<8x16xf32>
    %394 = arith.addf %392, %393 : vector<8x16xf32>
    %395 = math.tanh %394 : vector<8x16xf32>
    %cst_72 = arith.constant dense<0.000000e+00> : vector<8x96xf32>
    %396 = tpu.matmul %395, %7, %cst_72 {dimension_numbers = #tpu.dot_dimension_numbers<[1], [0], [0], [1], [0, 0, 1, 1], [], []>} : vector<8x16xf32>, vector<16x96xf32>, vector<8x96xf32> -> vector<8x96xf32>
    %397 = vector.broadcast %11 : vector<1x96xf32> to vector<8x96xf32>
    %398 = arith.addf %396, %397 : vector<8x96xf32>
    %cst_73 = arith.constant dense<0.000000e+00> : vector<8x96xf32>
    %399 = tpu.matmul %363, %8, %cst_73 {dimension_numbers = #tpu.dot_dimension_numbers<[1], [0], [0], [1], [0, 0, 1, 1], [], []>} : vector<8x32xf32>, vector<32x96xf32>, vector<8x96xf32> -> vector<8x96xf32>
    %400 = vector.extract_strided_slice %398 {offsets = [0, 0], sizes = [8, 64], strides = [1, 1]} : vector<8x96xf32> to vector<8x64xf32>
    %401 = vector.extract_strided_slice %399 {offsets = [0, 0], sizes = [8, 64], strides = [1, 1]} : vector<8x96xf32> to vector<8x64xf32>
    %402 = arith.addf %400, %401 : vector<8x64xf32>
    %403 = arith.negf %402 : vector<8x64xf32>
    %404 = math.exp %403 : vector<8x64xf32>
    %cst_74 = arith.constant 1.000000e+00 : f32
    %405 = vector.broadcast %cst_74 : f32 to vector<8x64xf32>
    %406 = arith.addf %405, %404 : vector<8x64xf32>
    %407 = arith.divf %405, %406 : vector<8x64xf32>
    %408 = vector.extract_strided_slice %407 {offsets = [0, 0], sizes = [8, 32], strides = [1, 1]} : vector<8x64xf32> to vector<8x32xf32>
    %409 = vector.extract_strided_slice %407 {offsets = [0, 32], sizes = [8, 32], strides = [1, 1]} : vector<8x64xf32> to vector<8x32xf32>
    %410 = vector.extract_strided_slice %398 {offsets = [0, 64], sizes = [8, 32], strides = [1, 1]} : vector<8x96xf32> to vector<8x32xf32>
    %411 = vector.extract_strided_slice %399 {offsets = [0, 64], sizes = [8, 32], strides = [1, 1]} : vector<8x96xf32> to vector<8x32xf32>
    %412 = vector.broadcast %12 : vector<1x32xf32> to vector<8x32xf32>
    %413 = arith.addf %411, %412 : vector<8x32xf32>
    %414 = arith.mulf %408, %413 : vector<8x32xf32>
    %415 = arith.addf %410, %414 : vector<8x32xf32>
    %416 = math.tanh %415 : vector<8x32xf32>
    %cst_75 = arith.constant 1.000000e+00 : f32
    %417 = vector.broadcast %cst_75 : f32 to vector<8x32xf32>
    %418 = arith.subf %417, %409 : vector<8x32xf32>
    %419 = arith.mulf %418, %416 : vector<8x32xf32>
    %420 = arith.mulf %409, %363 : vector<8x32xf32>
    %421 = arith.addf %419, %420 : vector<8x32xf32>
    %cst_76 = arith.constant dense<0.000000e+00> : vector<8x16xf32>
    %422 = tpu.matmul %421, %9, %cst_76 {dimension_numbers = #tpu.dot_dimension_numbers<[1], [0], [0], [1], [0, 0, 1, 1], [], []>} : vector<8x32xf32>, vector<32x16xf32>, vector<8x16xf32> -> vector<8x16xf32>
    %423 = vector.broadcast %13 : vector<1x16xf32> to vector<8x16xf32>
    %424 = arith.addf %422, %423 : vector<8x16xf32>
    %425 = math.tanh %424 : vector<8x16xf32>
    %426 = vector.extract_strided_slice %17 {offsets = [56, 0], sizes = [8, 96], strides = [1, 1]} : vector<64x96xf32> to vector<8x96xf32>
    %cst_77 = arith.constant dense<0.000000e+00> : vector<8x96xf32>
    %427 = tpu.matmul %391, %1, %cst_77 {dimension_numbers = #tpu.dot_dimension_numbers<[1], [0], [0], [1], [0, 0, 1, 1], [], []>} : vector<8x32xf32>, vector<32x96xf32>, vector<8x96xf32> -> vector<8x96xf32>
    %428 = vector.extract_strided_slice %426 {offsets = [0, 0], sizes = [8, 64], strides = [1, 1]} : vector<8x96xf32> to vector<8x64xf32>
    %429 = vector.extract_strided_slice %427 {offsets = [0, 0], sizes = [8, 64], strides = [1, 1]} : vector<8x96xf32> to vector<8x64xf32>
    %430 = arith.addf %428, %429 : vector<8x64xf32>
    %431 = arith.negf %430 : vector<8x64xf32>
    %432 = math.exp %431 : vector<8x64xf32>
    %cst_78 = arith.constant 1.000000e+00 : f32
    %433 = vector.broadcast %cst_78 : f32 to vector<8x64xf32>
    %434 = arith.addf %433, %432 : vector<8x64xf32>
    %435 = arith.divf %433, %434 : vector<8x64xf32>
    %436 = vector.extract_strided_slice %435 {offsets = [0, 0], sizes = [8, 32], strides = [1, 1]} : vector<8x64xf32> to vector<8x32xf32>
    %437 = vector.extract_strided_slice %435 {offsets = [0, 32], sizes = [8, 32], strides = [1, 1]} : vector<8x64xf32> to vector<8x32xf32>
    %438 = vector.extract_strided_slice %426 {offsets = [0, 64], sizes = [8, 32], strides = [1, 1]} : vector<8x96xf32> to vector<8x32xf32>
    %439 = vector.extract_strided_slice %427 {offsets = [0, 64], sizes = [8, 32], strides = [1, 1]} : vector<8x96xf32> to vector<8x32xf32>
    %440 = vector.broadcast %5 : vector<1x32xf32> to vector<8x32xf32>
    %441 = arith.addf %439, %440 : vector<8x32xf32>
    %442 = arith.mulf %436, %441 : vector<8x32xf32>
    %443 = arith.addf %438, %442 : vector<8x32xf32>
    %444 = math.tanh %443 : vector<8x32xf32>
    %cst_79 = arith.constant 1.000000e+00 : f32
    %445 = vector.broadcast %cst_79 : f32 to vector<8x32xf32>
    %446 = arith.subf %445, %437 : vector<8x32xf32>
    %447 = arith.mulf %446, %444 : vector<8x32xf32>
    %448 = arith.mulf %437, %391 : vector<8x32xf32>
    %449 = arith.addf %447, %448 : vector<8x32xf32>
    %cst_80 = arith.constant dense<0.000000e+00> : vector<8x16xf32>
    %450 = tpu.matmul %449, %2, %cst_80 {dimension_numbers = #tpu.dot_dimension_numbers<[1], [0], [0], [1], [0, 0, 1, 1], [], []>} : vector<8x32xf32>, vector<32x16xf32>, vector<8x16xf32> -> vector<8x16xf32>
    %451 = vector.broadcast %6 : vector<1x16xf32> to vector<8x16xf32>
    %452 = arith.addf %450, %451 : vector<8x16xf32>
    %453 = math.tanh %452 : vector<8x16xf32>
    %cst_81 = arith.constant dense<0.000000e+00> : vector<8x96xf32>
    %454 = tpu.matmul %453, %7, %cst_81 {dimension_numbers = #tpu.dot_dimension_numbers<[1], [0], [0], [1], [0, 0, 1, 1], [], []>} : vector<8x16xf32>, vector<16x96xf32>, vector<8x96xf32> -> vector<8x96xf32>
    %455 = vector.broadcast %11 : vector<1x96xf32> to vector<8x96xf32>
    %456 = arith.addf %454, %455 : vector<8x96xf32>
    %cst_82 = arith.constant dense<0.000000e+00> : vector<8x96xf32>
    %457 = tpu.matmul %421, %8, %cst_82 {dimension_numbers = #tpu.dot_dimension_numbers<[1], [0], [0], [1], [0, 0, 1, 1], [], []>} : vector<8x32xf32>, vector<32x96xf32>, vector<8x96xf32> -> vector<8x96xf32>
    %458 = vector.extract_strided_slice %456 {offsets = [0, 0], sizes = [8, 64], strides = [1, 1]} : vector<8x96xf32> to vector<8x64xf32>
    %459 = vector.extract_strided_slice %457 {offsets = [0, 0], sizes = [8, 64], strides = [1, 1]} : vector<8x96xf32> to vector<8x64xf32>
    %460 = arith.addf %458, %459 : vector<8x64xf32>
    %461 = arith.negf %460 : vector<8x64xf32>
    %462 = math.exp %461 : vector<8x64xf32>
    %cst_83 = arith.constant 1.000000e+00 : f32
    %463 = vector.broadcast %cst_83 : f32 to vector<8x64xf32>
    %464 = arith.addf %463, %462 : vector<8x64xf32>
    %465 = arith.divf %463, %464 : vector<8x64xf32>
    %466 = vector.extract_strided_slice %465 {offsets = [0, 0], sizes = [8, 32], strides = [1, 1]} : vector<8x64xf32> to vector<8x32xf32>
    %467 = vector.extract_strided_slice %465 {offsets = [0, 32], sizes = [8, 32], strides = [1, 1]} : vector<8x64xf32> to vector<8x32xf32>
    %468 = vector.extract_strided_slice %456 {offsets = [0, 64], sizes = [8, 32], strides = [1, 1]} : vector<8x96xf32> to vector<8x32xf32>
    %469 = vector.extract_strided_slice %457 {offsets = [0, 64], sizes = [8, 32], strides = [1, 1]} : vector<8x96xf32> to vector<8x32xf32>
    %470 = vector.broadcast %12 : vector<1x32xf32> to vector<8x32xf32>
    %471 = arith.addf %469, %470 : vector<8x32xf32>
    %472 = arith.mulf %466, %471 : vector<8x32xf32>
    %473 = arith.addf %468, %472 : vector<8x32xf32>
    %474 = math.tanh %473 : vector<8x32xf32>
    %cst_84 = arith.constant 1.000000e+00 : f32
    %475 = vector.broadcast %cst_84 : f32 to vector<8x32xf32>
    %476 = arith.subf %475, %467 : vector<8x32xf32>
    %477 = arith.mulf %476, %474 : vector<8x32xf32>
    %478 = arith.mulf %467, %421 : vector<8x32xf32>
    %479 = arith.addf %477, %478 : vector<8x32xf32>
    %cst_85 = arith.constant dense<0.000000e+00> : vector<8x16xf32>
    %480 = tpu.matmul %479, %9, %cst_85 {dimension_numbers = #tpu.dot_dimension_numbers<[1], [0], [0], [1], [0, 0, 1, 1], [], []>} : vector<8x32xf32>, vector<32x16xf32>, vector<8x16xf32> -> vector<8x16xf32>
    %481 = vector.broadcast %13 : vector<1x16xf32> to vector<8x16xf32>
    %482 = arith.addf %480, %481 : vector<8x16xf32>
    %483 = math.tanh %482 : vector<8x16xf32>
    %484 = tpu.concatenate %77, %135, %193, %251, %309, %367, %425, %483 in 0 : vector<8x16xf32>, vector<8x16xf32>, vector<8x16xf32>, vector<8x16xf32>, vector<8x16xf32>, vector<8x16xf32>, vector<8x16xf32>, vector<8x16xf32> -> vector<64x16xf32>
    %c0_86 = arith.constant 0 : index
    %c0_87 = arith.constant 0 : index
    %485 = vector.load %arg4[%c0_86, %c0_87] : memref<64x16xf32, #tpu.memory_space<vmem>>, vector<64x16xf32>
    tpu.vector_store %arg4[%c0_86, %c0_87], %484 {strides = array<i32>} : memref<64x16xf32, #tpu.memory_space<vmem>>, vector<64x16xf32>,
    return
  }
}

</mosaic_0001>

<llo_original>
// kernel: tracking_forward_pallas.1
$region0: #{tracking_forward_pallas.1}
  #allocation0 [shape = 'u32[]', space=smem, size = 0x4, offset = 0x4, fixed_abs, tag = 'smem constant byte address 0x4 - core index']
  #allocation1 [shape = 'u32[72,128]{1,0:T(1,128)}', space=vmem, size = 0x9000, scoped, tag = 'internal scratch']
  %s0 = inlined_call_operand.vmem [shape: f32[64,8], index: 0, kind: input, shape index: {}]
  %s1 = inlined_call_operand.vmem [shape: f32[8,32], index: 1, kind: input, shape index: {}]
  %s2 = inlined_call_operand.vmem [shape: f32[80,96], index: 2, kind: input, shape index: {}]
  %s3 = inlined_call_operand.vmem [shape: f32[88,96], index: 3, kind: input, shape index: {}]
  %s4 = inlined_call_operand.vmem [shape: f32[64,16], index: 4, kind: output, shape index: {}]
  %s5 = sld [smem:[#allocation0]]
  $region26: #{tracking_forward_pallas.1} parent=0
    _
  %s7 = ssub.s32 1, %s5
  %s8 = scalar_select 0, %s7, %s5
  // Predicated region
  $region2: #{tracking_forward_pallas.1} parent=0 // pred_check
    _
  $region3: #{tracking_forward_pallas.1} parent=0 // pred_check_branch
    %10 = sbr.rel (0) target = $region5
  $region4: #{tracking_forward_pallas.1} parent=0 // pred_region
    _
  $region5: #{tracking_forward_pallas.1} parent=0 // pred_fallthru
    _
  // Predicated region
  $region6: #{tracking_forward_pallas.1} parent=0 // pred_check
    _
  $region7: #{tracking_forward_pallas.1} parent=0 // pred_check_branch
    %12 = sbr.rel (0) target = $region9
  $region8: #{tracking_forward_pallas.1} parent=0 // pred_region
    _
  $region9: #{tracking_forward_pallas.1} parent=0 // pred_fallthru
    _
  // Predicated region
  $region10: #{tracking_forward_pallas.1} parent=0 // pred_check
    _
  $region11: #{tracking_forward_pallas.1} parent=0 // pred_check_branch
    %14 = sbr.rel (0) target = $region13
  $region12: #{tracking_forward_pallas.1} parent=0 // pred_region
    _
  $region13: #{tracking_forward_pallas.1} parent=0 // pred_fallthru
    _
  // Predicated region
  $region14: #{tracking_forward_pallas.1} parent=0 // pred_check
    _
  $region15: #{tracking_forward_pallas.1} parent=0 // pred_check_branch
    %16 = sbr.rel (0) target = $region17
  $region16: #{tracking_forward_pallas.1} parent=0 // pred_region
    _
  $region17: #{tracking_forward_pallas.1} parent=0 // pred_fallthru
    _
  %v17 = vld [vmem:[%s2] sm:$0xff]
  %v18 = vld [vmem:[%s2 + $0x8] sm:$0xff]
  %v19 = vld [vmem:[%s2 + $0x10] sm:$0xff]
  %v20 = vld [vmem:[%s2 + $0x18] sm:$0xff]
  %v21 = vld [vmem:[%s2 + $0x20] sm:$0xff]
  %v22 = vld [vmem:[%s2 + $0x28] sm:$0xff]
  %v23 = vld [vmem:[%s2 + $0x30] sm:$0xff]
  %v24 = vld [vmem:[%s2 + $0x38] sm:$0xff]
  %v25 = vld [vmem:[%s2 + $0x40] sm:$0xff]
  %v26 = vld [vmem:[%s2 + $0x48] sm:$0xff]
  %v27 = vld [vmem:[%s3] sm:$0xff]
  %v28 = vld [vmem:[%s3 + $0x8] sm:$0xff]
  %v29 = vld [vmem:[%s3 + $0x10] sm:$0xff]
  %v30 = vld [vmem:[%s3 + $0x18] sm:$0xff]
  %v31 = vld [vmem:[%s3 + $0x20] sm:$0xff]
  %v32 = vld [vmem:[%s3 + $0x28] sm:$0xff]
  %v33 = vld [vmem:[%s3 + $0x30] sm:$0xff]
  %v34 = vld [vmem:[%s3 + $0x38] sm:$0xff]
  %v35 = vld [vmem:[%s3 + $0x40] sm:$0xff]
  %v36 = vld [vmem:[%s3 + $0x48] sm:$0xff]
  %v37 = vld [vmem:[%s3 + $0x50] sm:$0xff]
  %v38 = vld [vmem:[%s0] sm:$0xff]
  %v39 = vld [vmem:[%s0 + $0x8] sm:$0xff]
  %v40 = vld [vmem:[%s0 + $0x10] sm:$0xff]
  %v41 = vld [vmem:[%s0 + $0x18] sm:$0xff]
  %v42 = vld [vmem:[%s0 + $0x20] sm:$0xff]
  %v43 = vld [vmem:[%s0 + $0x28] sm:$0xff]
  %v44 = vld [vmem:[%s0 + $0x30] sm:$0xff]
  %v45 = vld [vmem:[%s0 + $0x38] sm:$0xff]
  %v46 = vperm.slane %v26, 0
  %vm47 = vcmask 64512
  %v49 = vsel %vm47, %v38, 0
  %v52 = vsel %vm47, %v39, 0
  %v55 = vsel %vm47, %v40, 0
  %v58 = vsel %vm47, %v41, 0
  %v61 = vsel %vm47, %v42, 0
  %v64 = vsel %vm47, %v43, 0
  %v67 = vsel %vm47, %v44, 0
  %v70 = vsel %vm47, %v45, 0
  %72 = vmatpush.msra.mxu0 0.0
  %73 = vmatpush.msra.mxu0 0.0
  %74 = vmatpush.msra.mxu0 0.0
  %75 = vmatpush.msra.mxu0 0.0
  %76 = vmatpush.msra.mxu0 0.0
  %77 = vmatpush.msra.mxu0 0.0
  %78 = vmatpush.msra.mxu0 0.0
  %79 = vmatpush.msra.mxu0 0.0
  %80 = vmatpush.msra.mxu0 0.0
  %81 = vmatpush.msra.mxu0 0.0
  %82 = vmatpush.msra.mxu0 0.0
  %83 = vmatpush.msra.mxu0 0.0
  %84 = vmatpush.msra.mxu0 0.0
  %85 = vmatpush.msra.mxu0 0.0
  %86 = vmatpush.msra.mxu0 0.0
  %87 = vmatpush.msra.mxu0 %v17
  %88 = vmatmul.f32.gmra.mxu0 %v49
  %v89 = vpop.f32.mrf.mxu0
  %v90 = vadd.f32 %v46, %v89
  %91 = vmatmul.f32.gmra.mxu0 %v52
  %v92 = vpop.f32.mrf.mxu0
  %v93 = vadd.f32 %v46, %v92
  %94 = vmatmul.f32.gmra.mxu0 %v55
  %v95 = vpop.f32.mrf.mxu0
  %v96 = vadd.f32 %v46, %v95
  %97 = vmatmul.f32.gmra.mxu0 %v58
  %v98 = vpop.f32.mrf.mxu0
  %v99 = vadd.f32 %v46, %v98
  %100 = vmatmul.f32.gmra.mxu0 %v61
  %v101 = vpop.f32.mrf.mxu0
  %v102 = vadd.f32 %v46, %v101
  %103 = vmatmul.f32.gmra.mxu0 %v64
  %v104 = vpop.f32.mrf.mxu0
  %v105 = vadd.f32 %v46, %v104
  %106 = vmatmul.f32.gmra.mxu0 %v67
  %v107 = vpop.f32.mrf.mxu0
  %v108 = vadd.f32 %v46, %v107
  %109 = vmatmul.f32.gmra.mxu0 %v70
  %v110 = vpop.f32.mrf.mxu0
  %v111 = vadd.f32 %v46, %v110
  %112 = vdwg.mxu0
  %v113 = vld [vmem:[%s1] sm:$0xff]
  %vm114 = vcmask 261120
  %v116 = vsel %vm114, %v113, 0
  %118 = vmatpush.msra.mxu0 0.0
  %119 = vmatpush.msra.mxu0 0.0
  %120 = vmatpush.msra.mxu0 0.0
  %121 = vmatpush.msra.mxu0 0.0
  %122 = vmatpush.msra.mxu0 0.0
  %123 = vmatpush.msra.mxu0 0.0
  %124 = vmatpush.msra.mxu0 0.0
  %125 = vmatpush.msra.mxu0 0.0
  %126 = vmatpush.msra.mxu0 0.0
  %127 = vmatpush.msra.mxu0 0.0
  %128 = vmatpush.msra.mxu0 0.0
  %129 = vmatpush.msra.mxu0 0.0
  %130 = vmatpush.msra.mxu0 %v21
  %131 = vmatpush.msra.mxu0 %v20
  %132 = vmatpush.msra.mxu0 %v19
  %133 = vmatpush.msra.mxu0 %v18
  %134 = vmatmul.f32.gmra.mxu0 %v116
  %v135 = vpop.f32.mrf.mxu0
  %v136 = vadd.f32 0.0, %v135
  %137 = vdwg.mxu0
  %v138 = vadd.f32 %v90, %v136
  %v139 = vxor.u32 %v138, 2147483648
  %v140 = vmul.f32 %v139, 1.442695
  %v141 = vpow.pop %v140
  %v142 = vadd.f32 %v141, 1.0
  %v143 = vrcp.pop %v142
  %v144 = vmul.f32 %v142, %v143
  %v145 = vsub.f32 1.0, %v144
  %v146 = vmul.f32 %v143, %v145
  %v147 = vadd.f32 %v143, %v146
  %vm148 = vweird.f32 %v142
  %vm149 = vweird.f32 %v143
  %vm150 = vmor %vm148, %vm149
  %v151 = vsel %vm150, %v143, %v147
  %v152 = vand.u32 2147483647, %v142
  %vm153 = vcmp.eq.f32.partialorder %v152, 8.507059e+37
  %v154 = vand.u32 %v142, 2147483648
  %v155 = vor.u32 1.1754944e-38, %v154
  %v156 = vsel %vm153, %v155, %v151
  %v157 = vmul.f32 1.0, %v156
  %v158 = vperm.slane %v26, 1
  %160 = vrot.lane.b32.xlu0 %v158, 64
  %v161 = vpop.permute.xlu0 %160
  %v163 = vadd.f32 %v136, %v161
  %165 = vrot.lane.b32.xlu0 %v163, 64
  %v166 = vpop.permute.xlu0 %165
  %v168 = vmul.f32 %v157, %v166
  %170 = vrot.lane.b32.xlu0 %v168, 64
  %v171 = vpop.permute.xlu0 %170
  %v173 = vadd.f32 %v90, %v171
  %v174 = vtanh.pop %v173
  %v175 = vsub.f32 1.0, %v157
  %177 = vrot.lane.b32.xlu0 %v174, 96
  %v178 = vpop.permute.xlu0 %177
  %v180 = vmul.f32 %v175, %v178
  %181 = vrot.lane.b32.xlu0 %v113, 32
  %v182 = vpop.permute.xlu0 %181
  %v184 = vmul.f32 %v157, %v182
  %v185 = vadd.f32 %v180, %v184
  %v186 = vperm.slane %v26, 2
  %188 = vrot.lane.b32.xlu0 %v185, 96
  %v189 = vpop.permute.xlu0 %188
  %v190 = vsel %vm114, %v189, 0
  %192 = vmatpush.msra.mxu0 0.0
  %193 = vmatpush.msra.mxu0 0.0
  %194 = vmatpush.msra.mxu0 0.0
  %195 = vmatpush.msra.mxu0 0.0
  %196 = vmatpush.msra.mxu0 0.0
  %197 = vmatpush.msra.mxu0 0.0
  %198 = vmatpush.msra.mxu0 0.0
  %199 = vmatpush.msra.mxu0 0.0
  %200 = vmatpush.msra.mxu0 0.0
  %201 = vmatpush.msra.mxu0 0.0
  %202 = vmatpush.msra.mxu0 0.0
  %203 = vmatpush.msra.mxu0 0.0
  %204 = vmatpush.msra.mxu0 %v25
  %205 = vmatpush.msra.mxu0 %v24
  %206 = vmatpush.msra.mxu0 %v23
  %207 = vmatpush.msra.mxu0 %v22
  %208 = vmatmul.f32.gmra.mxu0 %v190
  %v209 = vpop.f32.mrf.mxu0
  %v210 = vadd.f32 %v186, %v209
  %211 = vdwg.mxu0
  %v212 = vtanh.pop %v210
  %v213 = vperm.slane %v37, 0
  %vm214 = vcmask 130048
  %v216 = vsel %vm214, %v212, 0
  %218 = vmatpush.msra.mxu0 0.0
  %219 = vmatpush.msra.mxu0 0.0
  %220 = vmatpush.msra.mxu0 0.0
  %221 = vmatpush.msra.mxu0 0.0
  %222 = vmatpush.msra.mxu0 0.0
  %223 = vmatpush.msra.mxu0 0.0
  %224 = vmatpush.msra.mxu0 0.0
  %225 = vmatpush.msra.mxu0 0.0
  %226 = vmatpush.msra.mxu0 0.0
  %227 = vmatpush.msra.mxu0 0.0
  %228 = vmatpush.msra.mxu0 0.0
  %229 = vmatpush.msra.mxu0 0.0
  %230 = vmatpush.msra.mxu0 0.0
  %231 = vmatpush.msra.mxu0 0.0
  %232 = vmatpush.msra.mxu0 %v28
  %233 = vmatpush.msra.mxu0 %v27
  %234 = vmatmul.f32.gmra.mxu0 %v216
  %v235 = vpop.f32.mrf.mxu0
  %v236 = vadd.f32 %v213, %v235
  %237 = vdwg.mxu0
  %v239 = vsel %vm114, 0.0, 0
  %241 = vmatpush.msra.mxu0 0.0
  %242 = vmatpush.msra.mxu0 0.0
  %243 = vmatpush.msra.mxu0 0.0
  %244 = vmatpush.msra.mxu0 0.0
  %245 = vmatpush.msra.mxu0 0.0
  %246 = vmatpush.msra.mxu0 0.0
  %247 = vmatpush.msra.mxu0 0.0
  %248 = vmatpush.msra.mxu0 0.0
  %249 = vmatpush.msra.mxu0 0.0
  %250 = vmatpush.msra.mxu0 0.0
  %251 = vmatpush.msra.mxu0 0.0
  %252 = vmatpush.msra.mxu0 0.0
  %253 = vmatpush.msra.mxu0 %v32
  %254 = vmatpush.msra.mxu0 %v31
  %255 = vmatpush.msra.mxu0 %v30
  %256 = vmatpush.msra.mxu0 %v29
  %257 = vmatmul.f32.gmra.mxu0 %v239
  %v258 = vpop.f32.mrf.mxu0
  %v259 = vadd.f32 0.0, %v258
  %260 = vdwg.mxu0
  %v261 = vadd.f32 %v236, %v259
  %v262 = vxor.u32 %v261, 2147483648
  %v263 = vmul.f32 %v262, 1.442695
  %v264 = vpow.pop %v263
  %v265 = vadd.f32 %v264, 1.0
  %v266 = vrcp.pop %v265
  %v267 = vmul.f32 %v265, %v266
  %v268 = vsub.f32 1.0, %v267
  %v269 = vmul.f32 %v266, %v268
  %v270 = vadd.f32 %v266, %v269
  %vm271 = vweird.f32 %v265
  %vm272 = vweird.f32 %v266
  %vm273 = vmor %vm271, %vm272
  %v274 = vsel %vm273, %v266, %v270
  %v275 = vand.u32 2147483647, %v265
  %vm276 = vcmp.eq.f32.partialorder %v275, 8.507059e+37
  %v277 = vand.u32 %v265, 2147483648
  %v278 = vor.u32 1.1754944e-38, %v277
  %v279 = vsel %vm276, %v278, %v274
  %v280 = vmul.f32 1.0, %v279
  %v281 = vperm.slane %v37, 1
  %283 = vrot.lane.b32.xlu0 %v281, 64
  %v284 = vpop.permute.xlu0 %283
  %v286 = vadd.f32 %v259, %v284
  %288 = vrot.lane.b32.xlu0 %v286, 64
  %v289 = vpop.permute.xlu0 %288
  %v291 = vmul.f32 %v280, %v289
  %293 = vrot.lane.b32.xlu0 %v291, 64
  %v294 = vpop.permute.xlu0 %293
  %v296 = vadd.f32 %v236, %v294
  %v297 = vtanh.pop %v296
  %v298 = vsub.f32 1.0, %v280
  %300 = vrot.lane.b32.xlu0 %v297, 96
  %v301 = vpop.permute.xlu0 %300
  %v303 = vmul.f32 %v298, %v301
  %v304 = vmul.f32 %v280, 0.0
  %v305 = vadd.f32 %v303, %v304
  %v306 = vperm.slane %v37, 2
  %308 = vrot.lane.b32.xlu0 %v305, 96
  %v309 = vpop.permute.xlu0 %308
  %v310 = vsel %vm114, %v309, 0
  %312 = vmatpush.msra.mxu0 0.0
  %313 = vmatpush.msra.mxu0 0.0
  %314 = vmatpush.msra.mxu0 0.0
  %315 = vmatpush.msra.mxu0 0.0
  %316 = vmatpush.msra.mxu0 0.0
  %317 = vmatpush.msra.mxu0 0.0
  %318 = vmatpush.msra.mxu0 0.0
  %319 = vmatpush.msra.mxu0 0.0
  %320 = vmatpush.msra.mxu0 0.0
  %321 = vmatpush.msra.mxu0 0.0
  %322 = vmatpush.msra.mxu0 0.0
  %323 = vmatpush.msra.mxu0 0.0
  %324 = vmatpush.msra.mxu0 %v36
  %325 = vmatpush.msra.mxu0 %v35
  %326 = vmatpush.msra.mxu0 %v34
  %327 = vmatpush.msra.mxu0 %v33
  %328 = vmatmul.f32.gmra.mxu0 %v310
  %v329 = vpop.f32.mrf.mxu0
  %v330 = vadd.f32 %v306, %v329
  %331 = vdwg.mxu0
  %v332 = vtanh.pop %v330
  %333 = vmatpush.msra.mxu0 0.0
  %334 = vmatpush.msra.mxu0 0.0
  %335 = vmatpush.msra.mxu0 0.0
  %336 = vmatpush.msra.mxu0 0.0
  %337 = vmatpush.msra.mxu0 0.0
  %338 = vmatpush.msra.mxu0 0.0
  %339 = vmatpush.msra.mxu0 0.0
  %340 = vmatpush.msra.mxu0 0.0
  %341 = vmatpush.msra.mxu0 0.0
  %342 = vmatpush.msra.mxu0 0.0
  %343 = vmatpush.msra.mxu0 0.0
  %344 = vmatpush.msra.mxu0 0.0
  %345 = vmatpush.msra.mxu0 %v21
  %346 = vmatpush.msra.mxu0 %v20
  %347 = vmatpush.msra.mxu0 %v19
  %348 = vmatpush.msra.mxu0 %v18
  %349 = vmatmul.f32.gmra.mxu0 %v190
  %v350 = vpop.f32.mrf.mxu0
  %v351 = vadd.f32 0.0, %v350
  %352 = vdwg.mxu0
  %v353 = vadd.f32 %v93, %v351
  %v354 = vxor.u32 %v353, 2147483648
  %v355 = vmul.f32 %v354, 1.442695
  %v356 = vpow.pop %v355
  %v357 = vadd.f32 %v356, 1.0
  %v358 = vrcp.pop %v357
  %v359 = vmul.f32 %v357, %v358
  %v360 = vsub.f32 1.0, %v359
  %v361 = vmul.f32 %v358, %v360
  %v362 = vadd.f32 %v358, %v361
  %vm363 = vweird.f32 %v357
  %vm364 = vweird.f32 %v358
  %vm365 = vmor %vm363, %vm364
  %v366 = vsel %vm365, %v358, %v362
  %v367 = vand.u32 2147483647, %v357
  %vm368 = vcmp.eq.f32.partialorder %v367, 8.507059e+37
  %v369 = vand.u32 %v357, 2147483648
  %v370 = vor.u32 1.1754944e-38, %v369
  %v371 = vsel %vm368, %v370, %v366
  %v372 = vmul.f32 1.0, %v371
  %v373 = vadd.f32 %v351, %v161
  %375 = vrot.lane.b32.xlu0 %v373, 64
  %v376 = vpop.permute.xlu0 %375
  %v378 = vmul.f32 %v372, %v376
  %380 = vrot.lane.b32.xlu0 %v378, 64
  %v381 = vpop.permute.xlu0 %380
  %v383 = vadd.f32 %v93, %v381
  %v384 = vtanh.pop %v383
  %v385 = vsub.f32 1.0, %v372
  %387 = vrot.lane.b32.xlu0 %v384, 96
  %v388 = vpop.permute.xlu0 %387
  %v390 = vmul.f32 %v385, %v388
  %v391 = vmul.f32 %v372, %v185
  %v392 = vadd.f32 %v390, %v391
  %394 = vrot.lane.b32.xlu0 %v392, 96
  %v395 = vpop.permute.xlu0 %394
  %v396 = vsel %vm114, %v395, 0
  %398 = vmatpush.msra.mxu0 0.0
  %399 = vmatpush.msra.mxu0 0.0
  %400 = vmatpush.msra.mxu0 0.0
  %401 = vmatpush.msra.mxu0 0.0
  %402 = vmatpush.msra.mxu0 0.0
  %403 = vmatpush.msra.mxu0 0.0
  %404 = vmatpush.msra.mxu0 0.0
  %405 = vmatpush.msra.mxu0 0.0
  %406 = vmatpush.msra.mxu0 0.0
  %407 = vmatpush.msra.mxu0 0.0
  %408 = vmatpush.msra.mxu0 0.0
  %409 = vmatpush.msra.mxu0 0.0
  %410 = vmatpush.msra.mxu0 %v25
  %411 = vmatpush.msra.mxu0 %v24
  %412 = vmatpush.msra.mxu0 %v23
  %413 = vmatpush.msra.mxu0 %v22
  %414 = vmatmul.f32.gmra.mxu0 %v396
  %v415 = vpop.f32.mrf.mxu0
  %v416 = vadd.f32 %v186, %v415
  %417 = vdwg.mxu0
  %v418 = vtanh.pop %v416
  %v420 = vsel %vm214, %v418, 0
  %422 = vmatpush.msra.mxu0 0.0
  %423 = vmatpush.msra.mxu0 0.0
  %424 = vmatpush.msra.mxu0 0.0
  %425 = vmatpush.msra.mxu0 0.0
  %426 = vmatpush.msra.mxu0 0.0
  %427 = vmatpush.msra.mxu0 0.0
  %428 = vmatpush.msra.mxu0 0.0
  %429 = vmatpush.msra.mxu0 0.0
  %430 = vmatpush.msra.mxu0 0.0
  %431 = vmatpush.msra.mxu0 0.0
  %432 = vmatpush.msra.mxu0 0.0
  %433 = vmatpush.msra.mxu0 0.0
  %434 = vmatpush.msra.mxu0 0.0
  %435 = vmatpush.msra.mxu0 0.0
  %436 = vmatpush.msra.mxu0 %v28
  %437 = vmatpush.msra.mxu0 %v27
  %438 = vmatmul.f32.gmra.mxu0 %v420
  %v439 = vpop.f32.mrf.mxu0
  %v440 = vadd.f32 %v213, %v439
  %441 = vdwg.mxu0
  %442 = vmatpush.msra.mxu0 0.0
  %443 = vmatpush.msra.mxu0 0.0
  %444 = vmatpush.msra.mxu0 0.0
  %445 = vmatpush.msra.mxu0 0.0
  %446 = vmatpush.msra.mxu0 0.0
  %447 = vmatpush.msra.mxu0 0.0
  %448 = vmatpush.msra.mxu0 0.0
  %449 = vmatpush.msra.mxu0 0.0
  %450 = vmatpush.msra.mxu0 0.0
  %451 = vmatpush.msra.mxu0 0.0
  %452 = vmatpush.msra.mxu0 0.0
  %453 = vmatpush.msra.mxu0 0.0
  %454 = vmatpush.msra.mxu0 %v32
  %455 = vmatpush.msra.mxu0 %v31
  %456 = vmatpush.msra.mxu0 %v30
  %457 = vmatpush.msra.mxu0 %v29
  %458 = vmatmul.f32.gmra.mxu0 %v310
  %v459 = vpop.f32.mrf.mxu0
  %v460 = vadd.f32 0.0, %v459
  %461 = vdwg.mxu0
  %v462 = vadd.f32 %v440, %v460
  %v463 = vxor.u32 %v462, 2147483648
  %v464 = vmul.f32 %v463, 1.442695
  %v465 = vpow.pop %v464
  %v466 = vadd.f32 %v465, 1.0
  %v467 = vrcp.pop %v466
  %v468 = vmul.f32 %v466, %v467
  %v469 = vsub.f32 1.0, %v468
  %v470 = vmul.f32 %v467, %v469
  %v471 = vadd.f32 %v467, %v470
  %vm472 = vweird.f32 %v466
  %vm473 = vweird.f32 %v467
  %vm474 = vmor %vm472, %vm473
  %v475 = vsel %vm474, %v467, %v471
  %v476 = vand.u32 2147483647, %v466
  %vm477 = vcmp.eq.f32.partialorder %v476, 8.507059e+37
  %v478 = vand.u32 %v466, 2147483648
  %v479 = vor.u32 1.1754944e-38, %v478
  %v480 = vsel %vm477, %v479, %v475
  %v481 = vmul.f32 1.0, %v480
  %v482 = vadd.f32 %v460, %v284
  %484 = vrot.lane.b32.xlu0 %v482, 64
  %v485 = vpop.permute.xlu0 %484
  %v487 = vmul.f32 %v481, %v485
  %489 = vrot.lane.b32.xlu0 %v487, 64
  %v490 = vpop.permute.xlu0 %489
  %v492 = vadd.f32 %v440, %v490
  %v493 = vtanh.pop %v492
  %v494 = vsub.f32 1.0, %v481
  %496 = vrot.lane.b32.xlu0 %v493, 96
  %v497 = vpop.permute.xlu0 %496
  %v499 = vmul.f32 %v494, %v497
  %v500 = vmul.f32 %v481, %v305
  %v501 = vadd.f32 %v499, %v500
  %503 = vrot.lane.b32.xlu0 %v501, 96
  %v504 = vpop.permute.xlu0 %503
  %v505 = vsel %vm114, %v504, 0
  %507 = vmatpush.msra.mxu0 0.0
  %508 = vmatpush.msra.mxu0 0.0
  %509 = vmatpush.msra.mxu0 0.0
  %510 = vmatpush.msra.mxu0 0.0
  %511 = vmatpush.msra.mxu0 0.0
  %512 = vmatpush.msra.mxu0 0.0
  %513 = vmatpush.msra.mxu0 0.0
  %514 = vmatpush.msra.mxu0 0.0
  %515 = vmatpush.msra.mxu0 0.0
  %516 = vmatpush.msra.mxu0 0.0
  %517 = vmatpush.msra.mxu0 0.0
  %518 = vmatpush.msra.mxu0 0.0
  %519 = vmatpush.msra.mxu0 %v36
  %520 = vmatpush.msra.mxu0 %v35
  %521 = vmatpush.msra.mxu0 %v34
  %522 = vmatpush.msra.mxu0 %v33
  %523 = vmatmul.f32.gmra.mxu0 %v505
  %v524 = vpop.f32.mrf.mxu0
  %v525 = vadd.f32 %v306, %v524
  %526 = vdwg.mxu0
  %v527 = vtanh.pop %v525
  %528 = vmatpush.msra.mxu0 0.0
  %529 = vmatpush.msra.mxu0 0.0
  %530 = vmatpush.msra.mxu0 0.0
  %531 = vmatpush.msra.mxu0 0.0
  %532 = vmatpush.msra.mxu0 0.0
  %533 = vmatpush.msra.mxu0 0.0
  %534 = vmatpush.msra.mxu0 0.0
  %535 = vmatpush.msra.mxu0 0.0
  %536 = vmatpush.msra.mxu0 0.0
  %537 = vmatpush.msra.mxu0 0.0
  %538 = vmatpush.msra.mxu0 0.0
  %539 = vmatpush.msra.mxu0 0.0
  %540 = vmatpush.msra.mxu0 %v21
  %541 = vmatpush.msra.mxu0 %v20
  %542 = vmatpush.msra.mxu0 %v19
  %543 = vmatpush.msra.mxu0 %v18
  %544 = vmatmul.f32.gmra.mxu0 %v396
  %v545 = vpop.f32.mrf.mxu0
  %v546 = vadd.f32 0.0, %v545
  %547 = vdwg.mxu0
  %v548 = vadd.f32 %v96, %v546
  %v549 = vxor.u32 %v548, 2147483648
  %v550 = vmul.f32 %v549, 1.442695
  %v551 = vpow.pop %v550
  %v552 = vadd.f32 %v551, 1.0
  %v553 = vrcp.pop %v552
  %v554 = vmul.f32 %v552, %v553
  %v555 = vsub.f32 1.0, %v554
  %v556 = vmul.f32 %v553, %v555
  %v557 = vadd.f32 %v553, %v556
  %vm558 = vweird.f32 %v552
  %vm559 = vweird.f32 %v553
  %vm560 = vmor %vm558, %vm559
  %v561 = vsel %vm560, %v553, %v557
  %v562 = vand.u32 2147483647, %v552
  %vm563 = vcmp.eq.f32.partialorder %v562, 8.507059e+37
  %v564 = vand.u32 %v552, 2147483648
  %v565 = vor.u32 1.1754944e-38, %v564
  %v566 = vsel %vm563, %v565, %v561
  %v567 = vmul.f32 1.0, %v566
  %v568 = vadd.f32 %v546, %v161
  %570 = vrot.lane.b32.xlu0 %v568, 64
  %v571 = vpop.permute.xlu0 %570
  %v573 = vmul.f32 %v567, %v571
  %575 = vrot.lane.b32.xlu0 %v573, 64
  %v576 = vpop.permute.xlu0 %575
  %v578 = vadd.f32 %v96, %v576
  %v579 = vtanh.pop %v578
  %v580 = vsub.f32 1.0, %v567
  %582 = vrot.lane.b32.xlu0 %v579, 96
  %v583 = vpop.permute.xlu0 %582
  %v585 = vmul.f32 %v580, %v583
  %v586 = vmul.f32 %v567, %v392
  %v587 = vadd.f32 %v585, %v586
  %589 = vrot.lane.b32.xlu0 %v587, 96
  %v590 = vpop.permute.xlu0 %589
  %v591 = vsel %vm114, %v590, 0
  %593 = vmatpush.msra.mxu0 0.0
  %594 = vmatpush.msra.mxu0 0.0
  %595 = vmatpush.msra.mxu0 0.0
  %596 = vmatpush.msra.mxu0 0.0
  %597 = vmatpush.msra.mxu0 0.0
  %598 = vmatpush.msra.mxu0 0.0
  %599 = vmatpush.msra.mxu0 0.0
  %600 = vmatpush.msra.mxu0 0.0
  %601 = vmatpush.msra.mxu0 0.0
  %602 = vmatpush.msra.mxu0 0.0
  %603 = vmatpush.msra.mxu0 0.0
  %604 = vmatpush.msra.mxu0 0.0
  %605 = vmatpush.msra.mxu0 %v25
  %606 = vmatpush.msra.mxu0 %v24
  %607 = vmatpush.msra.mxu0 %v23
  %608 = vmatpush.msra.mxu0 %v22
  %609 = vmatmul.f32.gmra.mxu0 %v591
  %v610 = vpop.f32.mrf.mxu0
  %v611 = vadd.f32 %v186, %v610
  %612 = vdwg.mxu0
  %v613 = vtanh.pop %v611
  %v615 = vsel %vm214, %v613, 0
  %617 = vmatpush.msra.mxu0 0.0
  %618 = vmatpush.msra.mxu0 0.0
  %619 = vmatpush.msra.mxu0 0.0
  %620 = vmatpush.msra.mxu0 0.0
  %621 = vmatpush.msra.mxu0 0.0
  %622 = vmatpush.msra.mxu0 0.0
  %623 = vmatpush.msra.mxu0 0.0
  %624 = vmatpush.msra.mxu0 0.0
  %625 = vmatpush.msra.mxu0 0.0
  %626 = vmatpush.msra.mxu0 0.0
  %627 = vmatpush.msra.mxu0 0.0
  %628 = vmatpush.msra.mxu0 0.0
  %629 = vmatpush.msra.mxu0 0.0
  %630 = vmatpush.msra.mxu0 0.0
  %631 = vmatpush.msra.mxu0 %v28
  %632 = vmatpush.msra.mxu0 %v27
  %633 = vmatmul.f32.gmra.mxu0 %v615
  %v634 = vpop.f32.mrf.mxu0
  %v635 = vadd.f32 %v213, %v634
  %636 = vdwg.mxu0
  %637 = vmatpush.msra.mxu0 0.0
  %638 = vmatpush.msra.mxu0 0.0
  %639 = vmatpush.msra.mxu0 0.0
  %640 = vmatpush.msra.mxu0 0.0
  %641 = vmatpush.msra.mxu0 0.0
  %642 = vmatpush.msra.mxu0 0.0
  %643 = vmatpush.msra.mxu0 0.0
  %644 = vmatpush.msra.mxu0 0.0
  %645 = vmatpush.msra.mxu0 0.0
  %646 = vmatpush.msra.mxu0 0.0
  %647 = vmatpush.msra.mxu0 0.0
  %648 = vmatpush.msra.mxu0 0.0
  %649 = vmatpush.msra.mxu0 %v32
  %650 = vmatpush.msra.mxu0 %v31
  %651 = vmatpush.msra.mxu0 %v30
  %652 = vmatpush.msra.mxu0 %v29
  %653 = vmatmul.f32.gmra.mxu0 %v505
  %v654 = vpop.f32.mrf.mxu0
  %v655 = vadd.f32 0.0, %v654
  %656 = vdwg.mxu0
  %v657 = vadd.f32 %v635, %v655
  %v658 = vxor.u32 %v657, 2147483648
  %v659 = vmul.f32 %v658, 1.442695
  %v660 = vpow.pop %v659
  %v661 = vadd.f32 %v660, 1.0
  %v662 = vrcp.pop %v661
  %v663 = vmul.f32 %v661, %v662
  %v664 = vsub.f32 1.0, %v663
  %v665 = vmul.f32 %v662, %v664
  %v666 = vadd.f32 %v662, %v665
  %vm667 = vweird.f32 %v661
  %vm668 = vweird.f32 %v662
  %vm669 = vmor %vm667, %vm668
  %v670 = vsel %vm669, %v662, %v666
  %v671 = vand.u32 2147483647, %v661
  %vm672 = vcmp.eq.f32.partialorder %v671, 8.507059e+37
  %v673 = vand.u32 %v661, 2147483648
  %v674 = vor.u32 1.1754944e-38, %v673
  %v675 = vsel %vm672, %v674, %v670
  %v676 = vmul.f32 1.0, %v675
  %v677 = vadd.f32 %v655, %v284
  %679 = vrot.lane.b32.xlu0 %v677, 64
  %v680 = vpop.permute.xlu0 %679
  %v682 = vmul.f32 %v676, %v680
  %684 = vrot.lane.b32.xlu0 %v682, 64
  %v685 = vpop.permute.xlu0 %684
  %v687 = vadd.f32 %v635, %v685
  %v688 = vtanh.pop %v687
  %v689 = vsub.f32 1.0, %v676
  %691 = vrot.lane.b32.xlu0 %v688, 96
  %v692 = vpop.permute.xlu0 %691
  %v694 = vmul.f32 %v689, %v692
  %v695 = vmul.f32 %v676, %v501
  %v696 = vadd.f32 %v694, %v695
  %698 = vrot.lane.b32.xlu0 %v696, 96
  %v699 = vpop.permute.xlu0 %698
  %v700 = vsel %vm114, %v699, 0
  %702 = vmatpush.msra.mxu0 0.0
  %703 = vmatpush.msra.mxu0 0.0
  %704 = vmatpush.msra.mxu0 0.0
  %705 = vmatpush.msra.mxu0 0.0
  %706 = vmatpush.msra.mxu0 0.0
  %707 = vmatpush.msra.mxu0 0.0
  %708 = vmatpush.msra.mxu0 0.0
  %709 = vmatpush.msra.mxu0 0.0
  %710 = vmatpush.msra.mxu0 0.0
  %711 = vmatpush.msra.mxu0 0.0
  %712 = vmatpush.msra.mxu0 0.0
  %713 = vmatpush.msra.mxu0 0.0
  %714 = vmatpush.msra.mxu0 %v36
  %715 = vmatpush.msra.mxu0 %v35
  %716 = vmatpush.msra.mxu0 %v34
  %717 = vmatpush.msra.mxu0 %v33
  %718 = vmatmul.f32.gmra.mxu0 %v700
  %v719 = vpop.f32.mrf.mxu0
  %v720 = vadd.f32 %v306, %v719
  %721 = vdwg.mxu0
  %v722 = vtanh.pop %v720
  %723 = vmatpush.msra.mxu0 0.0
  %724 = vmatpush.msra.mxu0 0.0
  %725 = vmatpush.msra.mxu0 0.0
  %726 = vmatpush.msra.mxu0 0.0
  %727 = vmatpush.msra.mxu0 0.0
  %728 = vmatpush.msra.mxu0 0.0
  %729 = vmatpush.msra.mxu0 0.0
  %730 = vmatpush.msra.mxu0 0.0
  %731 = vmatpush.msra.mxu0 0.0
  %732 = vmatpush.msra.mxu0 0.0
  %733 = vmatpush.msra.mxu0 0.0
  %734 = vmatpush.msra.mxu0 0.0
  %735 = vmatpush.msra.mxu0 %v21
  %736 = vmatpush.msra.mxu0 %v20
  %737 = vmatpush.msra.mxu0 %v19
  %738 = vmatpush.msra.mxu0 %v18
  %739 = vmatmul.f32.gmra.mxu0 %v591
  %v740 = vpop.f32.mrf.mxu0
  %v741 = vadd.f32 0.0, %v740
  %742 = vdwg.mxu0
  %v743 = vadd.f32 %v99, %v741
  %v744 = vxor.u32 %v743, 2147483648
  %v745 = vmul.f32 %v744, 1.442695
  %v746 = vpow.pop %v745
  %v747 = vadd.f32 %v746, 1.0
  %v748 = vrcp.pop %v747
  %v749 = vmul.f32 %v747, %v748
  %v750 = vsub.f32 1.0, %v749
  %v751 = vmul.f32 %v748, %v750
  %v752 = vadd.f32 %v748, %v751
  %vm753 = vweird.f32 %v747
  %vm754 = vweird.f32 %v748
  %vm755 = vmor %vm753, %vm754
  %v756 = vsel %vm755, %v748, %v752
  %v757 = vand.u32 2147483647, %v747
  %vm758 = vcmp.eq.f32.partialorder %v757, 8.507059e+37
  %v759 = vand.u32 %v747, 2147483648
  %v760 = vor.u32 1.1754944e-38, %v759
  %v761 = vsel %vm758, %v760, %v756
  %v762 = vmul.f32 1.0, %v761
  %v763 = vadd.f32 %v741, %v161
  %765 = vrot.lane.b32.xlu0 %v763, 64
  %v766 = vpop.permute.xlu0 %765
  %v768 = vmul.f32 %v762, %v766
  %770 = vrot.lane.b32.xlu0 %v768, 64
  %v771 = vpop.permute.xlu0 %770
  %v773 = vadd.f32 %v99, %v771
  %v774 = vtanh.pop %v773
  %v775 = vsub.f32 1.0, %v762
  %777 = vrot.lane.b32.xlu0 %v774, 96
  %v778 = vpop.permute.xlu0 %777
  %v780 = vmul.f32 %v775, %v778
  %v781 = vmul.f32 %v762, %v587
  %v782 = vadd.f32 %v780, %v781
  %784 = vrot.lane.b32.xlu0 %v782, 96
  %v785 = vpop.permute.xlu0 %784
  %v786 = vsel %vm114, %v785, 0
  %788 = vmatpush.msra.mxu0 0.0
  %789 = vmatpush.msra.mxu0 0.0
  %790 = vmatpush.msra.mxu0 0.0
  %791 = vmatpush.msra.mxu0 0.0
  %792 = vmatpush.msra.mxu0 0.0
  %793 = vmatpush.msra.mxu0 0.0
  %794 = vmatpush.msra.mxu0 0.0
  %795 = vmatpush.msra.mxu0 0.0
  %796 = vmatpush.msra.mxu0 0.0
  %797 = vmatpush.msra.mxu0 0.0
  %798 = vmatpush.msra.mxu0 0.0
  %799 = vmatpush.msra.mxu0 0.0
  %800 = vmatpush.msra.mxu0 %v25
  %801 = vmatpush.msra.mxu0 %v24
  %802 = vmatpush.msra.mxu0 %v23
  %803 = vmatpush.msra.mxu0 %v22
  %804 = vmatmul.f32.gmra.mxu0 %v786
  %v805 = vpop.f32.mrf.mxu0
  %v806 = vadd.f32 %v186, %v805
  %807 = vdwg.mxu0
  %v808 = vtanh.pop %v806
  %v810 = vsel %vm214, %v808, 0
  %812 = vmatpush.msra.mxu0 0.0
  %813 = vmatpush.msra.mxu0 0.0
  %814 = vmatpush.msra.mxu0 0.0
  %815 = vmatpush.msra.mxu0 0.0
  %816 = vmatpush.msra.mxu0 0.0
  %817 = vmatpush.msra.mxu0 0.0
  %818 = vmatpush.msra.mxu0 0.0
  %819 = vmatpush.msra.mxu0 0.0
  %820 = vmatpush.msra.mxu0 0.0
  %821 = vmatpush.msra.mxu0 0.0
  %822 = vmatpush.msra.mxu0 0.0
  %823 = vmatpush.msra.mxu0 0.0
  %824 = vmatpush.msra.mxu0 0.0
  %825 = vmatpush.msra.mxu0 0.0
  %826 = vmatpush.msra.mxu0 %v28
  %827 = vmatpush.msra.mxu0 %v27
  %828 = vmatmul.f32.gmra.mxu0 %v810
  %v829 = vpop.f32.mrf.mxu0
  %v830 = vadd.f32 %v213, %v829
  %831 = vdwg.mxu0
  %832 = vmatpush.msra.mxu0 0.0
  %833 = vmatpush.msra.mxu0 0.0
  %834 = vmatpush.msra.mxu0 0.0
  %835 = vmatpush.msra.mxu0 0.0
  %836 = vmatpush.msra.mxu0 0.0
  %837 = vmatpush.msra.mxu0 0.0
  %838 = vmatpush.msra.mxu0 0.0
  %839 = vmatpush.msra.mxu0 0.0
  %840 = vmatpush.msra.mxu0 0.0
  %841 = vmatpush.msra.mxu0 0.0
  %842 = vmatpush.msra.mxu0 0.0
  %843 = vmatpush.msra.mxu0 0.0
  %844 = vmatpush.msra.mxu0 %v32
  %845 = vmatpush.msra.mxu0 %v31
  %846 = vmatpush.msra.mxu0 %v30
  %847 = vmatpush.msra.mxu0 %v29
  %848 = vmatmul.f32.gmra.mxu0 %v700
  %v849 = vpop.f32.mrf.mxu0
  %v850 = vadd.f32 0.0, %v849
  %851 = vdwg.mxu0
  %v852 = vadd.f32 %v830, %v850
  %v853 = vxor.u32 %v852, 2147483648
  %v854 = vmul.f32 %v853, 1.442695
  %v855 = vpow.pop %v854
  %v856 = vadd.f32 %v855, 1.0
  %v857 = vrcp.pop %v856
  %v858 = vmul.f32 %v856, %v857
  %v859 = vsub.f32 1.0, %v858
  %v860 = vmul.f32 %v857, %v859
  %v861 = vadd.f32 %v857, %v860
  %vm862 = vweird.f32 %v856
  %vm863 = vweird.f32 %v857
  %vm864 = vmor %vm862, %vm863
  %v865 = vsel %vm864, %v857, %v861
  %v866 = vand.u32 2147483647, %v856
  %vm867 = vcmp.eq.f32.partialorder %v866, 8.507059e+37
  %v868 = vand.u32 %v856, 2147483648
  %v869 = vor.u32 1.1754944e-38, %v868
  %v870 = vsel %vm867, %v869, %v865
  %v871 = vmul.f32 1.0, %v870
  %v872 = vadd.f32 %v850, %v284
  %874 = vrot.lane.b32.xlu0 %v872, 64
  %v875 = vpop.permute.xlu0 %874
  %v877 = vmul.f32 %v871, %v875
  %879 = vrot.lane.b32.xlu0 %v877, 64
  %v880 = vpop.permute.xlu0 %879
  %v882 = vadd.f32 %v830, %v880
  %v883 = vtanh.pop %v882
  %v884 = vsub.f32 1.0, %v871
  %886 = vrot.lane.b32.xlu0 %v883, 96
  %v887 = vpop.permute.xlu0 %886
  %v889 = vmul.f32 %v884, %v887
  %v890 = vmul.f32 %v871, %v696
  %v891 = vadd.f32 %v889, %v890
  %893 = vrot.lane.b32.xlu0 %v891, 96
  %v894 = vpop.permute.xlu0 %893
  %v895 = vsel %vm114, %v894, 0
  %897 = vmatpush.msra.mxu0 0.0
  %898 = vmatpush.msra.mxu0 0.0
  %899 = vmatpush.msra.mxu0 0.0
  %900 = vmatpush.msra.mxu0 0.0
  %901 = vmatpush.msra.mxu0 0.0
  %902 = vmatpush.msra.mxu0 0.0
  %903 = vmatpush.msra.mxu0 0.0
  %904 = vmatpush.msra.mxu0 0.0
  %905 = vmatpush.msra.mxu0 0.0
  %906 = vmatpush.msra.mxu0 0.0
  %907 = vmatpush.msra.mxu0 0.0
  %908 = vmatpush.msra.mxu0 0.0
  %909 = vmatpush.msra.mxu0 %v36
  %910 = vmatpush.msra.mxu0 %v35
  %911 = vmatpush.msra.mxu0 %v34
  %912 = vmatpush.msra.mxu0 %v33
  %913 = vmatmul.f32.gmra.mxu0 %v895
  %v914 = vpop.f32.mrf.mxu0
  %v915 = vadd.f32 %v306, %v914
  %916 = vdwg.mxu0
  %v917 = vtanh.pop %v915
  %918 = vmatpush.msra.mxu0 0.0
  %919 = vmatpush.msra.mxu0 0.0
  %920 = vmatpush.msra.mxu0 0.0
  %921 = vmatpush.msra.mxu0 0.0
  %922 = vmatpush.msra.mxu0 0.0
  %923 = vmatpush.msra.mxu0 0.0
  %924 = vmatpush.msra.mxu0 0.0
  %925 = vmatpush.msra.mxu0 0.0
  %926 = vmatpush.msra.mxu0 0.0
  %927 = vmatpush.msra.mxu0 0.0
  %928 = vmatpush.msra.mxu0 0.0
  %929 = vmatpush.msra.mxu0 0.0
  %930 = vmatpush.msra.mxu0 %v21
  %931 = vmatpush.msra.mxu0 %v20
  %932 = vmatpush.msra.mxu0 %v19
  %933 = vmatpush.msra.mxu0 %v18
  %934 = vmatmul.f32.gmra.mxu0 %v786
  %v935 = vpop.f32.mrf.mxu0
  %v936 = vadd.f32 0.0, %v935
  %937 = vdwg.mxu0
  %v938 = vadd.f32 %v102, %v936
  %v939 = vxor.u32 %v938, 2147483648
  %v940 = vmul.f32 %v939, 1.442695
  %v941 = vpow.pop %v940
  %v942 = vadd.f32 %v941, 1.0
  %v943 = vrcp.pop %v942
  %v944 = vmul.f32 %v942, %v943
  %v945 = vsub.f32 1.0, %v944
  %v946 = vmul.f32 %v943, %v945
  %v947 = vadd.f32 %v943, %v946
  %vm948 = vweird.f32 %v942
  %vm949 = vweird.f32 %v943
  %vm950 = vmor %vm948, %vm949
  %v951 = vsel %vm950, %v943, %v947
  %v952 = vand.u32 2147483647, %v942
  %vm953 = vcmp.eq.f32.partialorder %v952, 8.507059e+37
  %v954 = vand.u32 %v942, 2147483648
  %v955 = vor.u32 1.1754944e-38, %v954
  %v956 = vsel %vm953, %v955, %v951
  %v957 = vmul.f32 1.0, %v956
  %v958 = vadd.f32 %v936, %v161
  %960 = vrot.lane.b32.xlu0 %v958, 64
  %v961 = vpop.permute.xlu0 %960
  %v963 = vmul.f32 %v957, %v961
  %965 = vrot.lane.b32.xlu0 %v963, 64
  %v966 = vpop.permute.xlu0 %965
  %v968 = vadd.f32 %v102, %v966
  %v969 = vtanh.pop %v968
  %v970 = vsub.f32 1.0, %v957
  %972 = vrot.lane.b32.xlu0 %v969, 96
  %v973 = vpop.permute.xlu0 %972
  %v975 = vmul.f32 %v970, %v973
  %v976 = vmul.f32 %v957, %v782
  %v977 = vadd.f32 %v975, %v976
  %979 = vrot.lane.b32.xlu0 %v977, 96
  %v980 = vpop.permute.xlu0 %979
  %v981 = vsel %vm114, %v980, 0
  %983 = vmatpush.msra.mxu0 0.0
  %984 = vmatpush.msra.mxu0 0.0
  %985 = vmatpush.msra.mxu0 0.0
  %986 = vmatpush.msra.mxu0 0.0
  %987 = vmatpush.msra.mxu0 0.0
  %988 = vmatpush.msra.mxu0 0.0
  %989 = vmatpush.msra.mxu0 0.0
  %990 = vmatpush.msra.mxu0 0.0
  %991 = vmatpush.msra.mxu0 0.0
  %992 = vmatpush.msra.mxu0 0.0
  %993 = vmatpush.msra.mxu0 0.0
  %994 = vmatpush.msra.mxu0 0.0
  %995 = vmatpush.msra.mxu0 %v25
  %996 = vmatpush.msra.mxu0 %v24
  %997 = vmatpush.msra.mxu0 %v23
  %998 = vmatpush.msra.mxu0 %v22
  %999 = vmatmul.f32.gmra.mxu0 %v981
  %v1000 = vpop.f32.mrf.mxu0
  %v1001 = vadd.f32 %v186, %v1000
  %1002 = vdwg.mxu0
  %v1003 = vtanh.pop %v1001
  %v1005 = vsel %vm214, %v1003, 0
  %1007 = vmatpush.msra.mxu0 0.0
  %1008 = vmatpush.msra.mxu0 0.0
  %1009 = vmatpush.msra.mxu0 0.0
  %1010 = vmatpush.msra.mxu0 0.0
  %1011 = vmatpush.msra.mxu0 0.0
  %1012 = vmatpush.msra.mxu0 0.0
  %1013 = vmatpush.msra.mxu0 0.0
  %1014 = vmatpush.msra.mxu0 0.0
  %1015 = vmatpush.msra.mxu0 0.0
  %1016 = vmatpush.msra.mxu0 0.0
  %1017 = vmatpush.msra.mxu0 0.0
  %1018 = vmatpush.msra.mxu0 0.0
  %1019 = vmatpush.msra.mxu0 0.0
  %1020 = vmatpush.msra.mxu0 0.0
  %1021 = vmatpush.msra.mxu0 %v28
  %1022 = vmatpush.msra.mxu0 %v27
  %1023 = vmatmul.f32.gmra.mxu0 %v1005
  %v1024 = vpop.f32.mrf.mxu0
  %v1025 = vadd.f32 %v213, %v1024
  %1026 = vdwg.mxu0
  %1027 = vmatpush.msra.mxu0 0.0
  %1028 = vmatpush.msra.mxu0 0.0
  %1029 = vmatpush.msra.mxu0 0.0
  %1030 = vmatpush.msra.mxu0 0.0
  %1031 = vmatpush.msra.mxu0 0.0
  %1032 = vmatpush.msra.mxu0 0.0
  %1033 = vmatpush.msra.mxu0 0.0
  %1034 = vmatpush.msra.mxu0 0.0
  %1035 = vmatpush.msra.mxu0 0.0
  %1036 = vmatpush.msra.mxu0 0.0
  %1037 = vmatpush.msra.mxu0 0.0
  %1038 = vmatpush.msra.mxu0 0.0
  %1039 = vmatpush.msra.mxu0 %v32
  %1040 = vmatpush.msra.mxu0 %v31
  %1041 = vmatpush.msra.mxu0 %v30
  %1042 = vmatpush.msra.mxu0 %v29
  %1043 = vmatmul.f32.gmra.mxu0 %v895
  %v1044 = vpop.f32.mrf.mxu0
  %v1045 = vadd.f32 0.0, %v1044
  %1046 = vdwg.mxu0
  %v1047 = vadd.f32 %v1025, %v1045
  %v1048 = vxor.u32 %v1047, 2147483648
  %v1049 = vmul.f32 %v1048, 1.442695
  %v1050 = vpow.pop %v1049
  %v1051 = vadd.f32 %v1050, 1.0
  %v1052 = vrcp.pop %v1051
  %v1053 = vmul.f32 %v1051, %v1052
  %v1054 = vsub.f32 1.0, %v1053
  %v1055 = vmul.f32 %v1052, %v1054
  %v1056 = vadd.f32 %v1052, %v1055
  %vm1057 = vweird.f32 %v1051
  %vm1058 = vweird.f32 %v1052
  %vm1059 = vmor %vm1057, %vm1058
  %v1060 = vsel %vm1059, %v1052, %v1056
  %v1061 = vand.u32 2147483647, %v1051
  %vm1062 = vcmp.eq.f32.partialorder %v1061, 8.507059e+37
  %v1063 = vand.u32 %v1051, 2147483648
  %v1064 = vor.u32 1.1754944e-38, %v1063
  %v1065 = vsel %vm1062, %v1064, %v1060
  %v1066 = vmul.f32 1.0, %v1065
  %v1067 = vadd.f32 %v1045, %v284
  %1069 = vrot.lane.b32.xlu0 %v1067, 64
  %v1070 = vpop.permute.xlu0 %1069
  %v1072 = vmul.f32 %v1066, %v1070
  %1074 = vrot.lane.b32.xlu0 %v1072, 64
  %v1075 = vpop.permute.xlu0 %1074
  %v1077 = vadd.f32 %v1025, %v1075
  %v1078 = vtanh.pop %v1077
  %v1079 = vsub.f32 1.0, %v1066
  %1081 = vrot.lane.b32.xlu0 %v1078, 96
  %v1082 = vpop.permute.xlu0 %1081
  %v1084 = vmul.f32 %v1079, %v1082
  %v1085 = vmul.f32 %v1066, %v891
  %v1086 = vadd.f32 %v1084, %v1085
  %1088 = vrot.lane.b32.xlu0 %v1086, 96
  %v1089 = vpop.permute.xlu0 %1088
  %v1090 = vsel %vm114, %v1089, 0
  %1092 = vmatpush.msra.mxu0 0.0
  %1093 = vmatpush.msra.mxu0 0.0
  %1094 = vmatpush.msra.mxu0 0.0
  %1095 = vmatpush.msra.mxu0 0.0
  %1096 = vmatpush.msra.mxu0 0.0
  %1097 = vmatpush.msra.mxu0 0.0
  %1098 = vmatpush.msra.mxu0 0.0
  %1099 = vmatpush.msra.mxu0 0.0
  %1100 = vmatpush.msra.mxu0 0.0
  %1101 = vmatpush.msra.mxu0 0.0
  %1102 = vmatpush.msra.mxu0 0.0
  %1103 = vmatpush.msra.mxu0 0.0
  %1104 = vmatpush.msra.mxu0 %v36
  %1105 = vmatpush.msra.mxu0 %v35
  %1106 = vmatpush.msra.mxu0 %v34
  %1107 = vmatpush.msra.mxu0 %v33
  %1108 = vmatmul.f32.gmra.mxu0 %v1090
  %v1109 = vpop.f32.mrf.mxu0
  %v1110 = vadd.f32 %v306, %v1109
  %1111 = vdwg.mxu0
  %v1112 = vtanh.pop %v1110
  %1113 = vmatpush.msra.mxu0 0.0
  %1114 = vmatpush.msra.mxu0 0.0
  %1115 = vmatpush.msra.mxu0 0.0
  %1116 = vmatpush.msra.mxu0 0.0
  %1117 = vmatpush.msra.mxu0 0.0
  %1118 = vmatpush.msra.mxu0 0.0
  %1119 = vmatpush.msra.mxu0 0.0
  %1120 = vmatpush.msra.mxu0 0.0
  %1121 = vmatpush.msra.mxu0 0.0
  %1122 = vmatpush.msra.mxu0 0.0
  %1123 = vmatpush.msra.mxu0 0.0
  %1124 = vmatpush.msra.mxu0 0.0
  %1125 = vmatpush.msra.mxu0 %v21
  %1126 = vmatpush.msra.mxu0 %v20
  %1127 = vmatpush.msra.mxu0 %v19
  %1128 = vmatpush.msra.mxu0 %v18
  %1129 = vmatmul.f32.gmra.mxu0 %v981
  %v1130 = vpop.f32.mrf.mxu0
  %v1131 = vadd.f32 0.0, %v1130
  %1132 = vdwg.mxu0
  %v1133 = vadd.f32 %v105, %v1131
  %v1134 = vxor.u32 %v1133, 2147483648
  %v1135 = vmul.f32 %v1134, 1.442695
  %v1136 = vpow.pop %v1135
  %v1137 = vadd.f32 %v1136, 1.0
  %v1138 = vrcp.pop %v1137
  %v1139 = vmul.f32 %v1137, %v1138
  %v1140 = vsub.f32 1.0, %v1139
  %v1141 = vmul.f32 %v1138, %v1140
  %v1142 = vadd.f32 %v1138, %v1141
  %vm1143 = vweird.f32 %v1137
  %vm1144 = vweird.f32 %v1138
  %vm1145 = vmor %vm1143, %vm1144
  %v1146 = vsel %vm1145, %v1138, %v1142
  %v1147 = vand.u32 2147483647, %v1137
  %vm1148 = vcmp.eq.f32.partialorder %v1147, 8.507059e+37
  %v1149 = vand.u32 %v1137, 2147483648
  %v1150 = vor.u32 1.1754944e-38, %v1149
  %v1151 = vsel %vm1148, %v1150, %v1146
  %v1152 = vmul.f32 1.0, %v1151
  %v1153 = vadd.f32 %v1131, %v161
  %1155 = vrot.lane.b32.xlu0 %v1153, 64
  %v1156 = vpop.permute.xlu0 %1155
  %v1158 = vmul.f32 %v1152, %v1156
  %1160 = vrot.lane.b32.xlu0 %v1158, 64
  %v1161 = vpop.permute.xlu0 %1160
  %v1163 = vadd.f32 %v105, %v1161
  %v1164 = vtanh.pop %v1163
  %v1165 = vsub.f32 1.0, %v1152
  %1167 = vrot.lane.b32.xlu0 %v1164, 96
  %v1168 = vpop.permute.xlu0 %1167
  %v1170 = vmul.f32 %v1165, %v1168
  %v1171 = vmul.f32 %v1152, %v977
  %v1172 = vadd.f32 %v1170, %v1171
  %1174 = vrot.lane.b32.xlu0 %v1172, 96
  %v1175 = vpop.permute.xlu0 %1174
  %v1176 = vsel %vm114, %v1175, 0
  %1178 = vmatpush.msra.mxu0 0.0
  %1179 = vmatpush.msra.mxu0 0.0
  %1180 = vmatpush.msra.mxu0 0.0
  %1181 = vmatpush.msra.mxu0 0.0
  %1182 = vmatpush.msra.mxu0 0.0
  %1183 = vmatpush.msra.mxu0 0.0
  %1184 = vmatpush.msra.mxu0 0.0
  %1185 = vmatpush.msra.mxu0 0.0
  %1186 = vmatpush.msra.mxu0 0.0
  %1187 = vmatpush.msra.mxu0 0.0
  %1188 = vmatpush.msra.mxu0 0.0
  %1189 = vmatpush.msra.mxu0 0.0
  %1190 = vmatpush.msra.mxu0 %v25
  %1191 = vmatpush.msra.mxu0 %v24
  %1192 = vmatpush.msra.mxu0 %v23
  %1193 = vmatpush.msra.mxu0 %v22
  %1194 = vmatmul.f32.gmra.mxu0 %v1176
  %v1195 = vpop.f32.mrf.mxu0
  %v1196 = vadd.f32 %v186, %v1195
  %1197 = vdwg.mxu0
  %v1198 = vtanh.pop %v1196
  %v1200 = vsel %vm214, %v1198, 0
  %1202 = vmatpush.msra.mxu0 0.0
  %1203 = vmatpush.msra.mxu0 0.0
  %1204 = vmatpush.msra.mxu0 0.0
  %1205 = vmatpush.msra.mxu0 0.0
  %1206 = vmatpush.msra.mxu0 0.0
  %1207 = vmatpush.msra.mxu0 0.0
  %1208 = vmatpush.msra.mxu0 0.0
  %1209 = vmatpush.msra.mxu0 0.0
  %1210 = vmatpush.msra.mxu0 0.0
  %1211 = vmatpush.msra.mxu0 0.0
  %1212 = vmatpush.msra.mxu0 0.0
  %1213 = vmatpush.msra.mxu0 0.0
  %1214 = vmatpush.msra.mxu0 0.0
  %1215 = vmatpush.msra.mxu0 0.0
  %1216 = vmatpush.msra.mxu0 %v28
  %1217 = vmatpush.msra.mxu0 %v27
  %1218 = vmatmul.f32.gmra.mxu0 %v1200
  %v1219 = vpop.f32.mrf.mxu0
  %v1220 = vadd.f32 %v213, %v1219
  %1221 = vdwg.mxu0
  %1222 = vmatpush.msra.mxu0 0.0
  %1223 = vmatpush.msra.mxu0 0.0
  %1224 = vmatpush.msra.mxu0 0.0
  %1225 = vmatpush.msra.mxu0 0.0
  %1226 = vmatpush.msra.mxu0 0.0
  %1227 = vmatpush.msra.mxu0 0.0
  %1228 = vmatpush.msra.mxu0 0.0
  %1229 = vmatpush.msra.mxu0 0.0
  %1230 = vmatpush.msra.mxu0 0.0
  %1231 = vmatpush.msra.mxu0 0.0
  %1232 = vmatpush.msra.mxu0 0.0
  %1233 = vmatpush.msra.mxu0 0.0
  %1234 = vmatpush.msra.mxu0 %v32
  %1235 = vmatpush.msra.mxu0 %v31
  %1236 = vmatpush.msra.mxu0 %v30
  %1237 = vmatpush.msra.mxu0 %v29
  %1238 = vmatmul.f32.gmra.mxu0 %v1090
  %v1239 = vpop.f32.mrf.mxu0
  %v1240 = vadd.f32 0.0, %v1239
  %1241 = vdwg.mxu0
  %v1242 = vadd.f32 %v1220, %v1240
  %v1243 = vxor.u32 %v1242, 2147483648
  %v1244 = vmul.f32 %v1243, 1.442695
  %v1245 = vpow.pop %v1244
  %v1246 = vadd.f32 %v1245, 1.0
  %v1247 = vrcp.pop %v1246
  %v1248 = vmul.f32 %v1246, %v1247
  %v1249 = vsub.f32 1.0, %v1248
  %v1250 = vmul.f32 %v1247, %v1249
  %v1251 = vadd.f32 %v1247, %v1250
  %vm1252 = vweird.f32 %v1246
  %vm1253 = vweird.f32 %v1247
  %vm1254 = vmor %vm1252, %vm1253
  %v1255 = vsel %vm1254, %v1247, %v1251
  %v1256 = vand.u32 2147483647, %v1246
  %vm1257 = vcmp.eq.f32.partialorder %v1256, 8.507059e+37
  %v1258 = vand.u32 %v1246, 2147483648
  %v1259 = vor.u32 1.1754944e-38, %v1258
  %v1260 = vsel %vm1257, %v1259, %v1255
  %v1261 = vmul.f32 1.0, %v1260
  %v1262 = vadd.f32 %v1240, %v284
  %1264 = vrot.lane.b32.xlu0 %v1262, 64
  %v1265 = vpop.permute.xlu0 %1264
  %v1267 = vmul.f32 %v1261, %v1265
  %1269 = vrot.lane.b32.xlu0 %v1267, 64
  %v1270 = vpop.permute.xlu0 %1269
  %v1272 = vadd.f32 %v1220, %v1270
  %v1273 = vtanh.pop %v1272
  %v1274 = vsub.f32 1.0, %v1261
  %1276 = vrot.lane.b32.xlu0 %v1273, 96
  %v1277 = vpop.permute.xlu0 %1276
  %v1279 = vmul.f32 %v1274, %v1277
  %v1280 = vmul.f32 %v1261, %v1086
  %v1281 = vadd.f32 %v1279, %v1280
  %1283 = vrot.lane.b32.xlu0 %v1281, 96
  %v1284 = vpop.permute.xlu0 %1283
  %v1285 = vsel %vm114, %v1284, 0
  %1287 = vmatpush.msra.mxu0 0.0
  %1288 = vmatpush.msra.mxu0 0.0
  %1289 = vmatpush.msra.mxu0 0.0
  %1290 = vmatpush.msra.mxu0 0.0
  %1291 = vmatpush.msra.mxu0 0.0
  %1292 = vmatpush.msra.mxu0 0.0
  %1293 = vmatpush.msra.mxu0 0.0
  %1294 = vmatpush.msra.mxu0 0.0
  %1295 = vmatpush.msra.mxu0 0.0
  %1296 = vmatpush.msra.mxu0 0.0
  %1297 = vmatpush.msra.mxu0 0.0
  %1298 = vmatpush.msra.mxu0 0.0
  %1299 = vmatpush.msra.mxu0 %v36
  %1300 = vmatpush.msra.mxu0 %v35
  %1301 = vmatpush.msra.mxu0 %v34
  %1302 = vmatpush.msra.mxu0 %v33
  %1303 = vmatmul.f32.gmra.mxu0 %v1285
  %v1304 = vpop.f32.mrf.mxu0
  %v1305 = vadd.f32 %v306, %v1304
  %1306 = vdwg.mxu0
  %v1307 = vtanh.pop %v1305
  %1308 = vmatpush.msra.mxu0 0.0
  %1309 = vmatpush.msra.mxu0 0.0
  %1310 = vmatpush.msra.mxu0 0.0
  %1311 = vmatpush.msra.mxu0 0.0
  %1312 = vmatpush.msra.mxu0 0.0
  %1313 = vmatpush.msra.mxu0 0.0
  %1314 = vmatpush.msra.mxu0 0.0
  %1315 = vmatpush.msra.mxu0 0.0
  %1316 = vmatpush.msra.mxu0 0.0
  %1317 = vmatpush.msra.mxu0 0.0
  %1318 = vmatpush.msra.mxu0 0.0
  %1319 = vmatpush.msra.mxu0 0.0
  %1320 = vmatpush.msra.mxu0 %v21
  %1321 = vmatpush.msra.mxu0 %v20
  %1322 = vmatpush.msra.mxu0 %v19
  %1323 = vmatpush.msra.mxu0 %v18
  %1324 = vmatmul.f32.gmra.mxu0 %v1176
  %v1325 = vpop.f32.mrf.mxu0
  %v1326 = vadd.f32 0.0, %v1325
  %1327 = vdwg.mxu0
  %v1328 = vadd.f32 %v108, %v1326
  %v1329 = vxor.u32 %v1328, 2147483648
  %v1330 = vmul.f32 %v1329, 1.442695
  %v1331 = vpow.pop %v1330
  %v1332 = vadd.f32 %v1331, 1.0
  %v1333 = vrcp.pop %v1332
  %v1334 = vmul.f32 %v1332, %v1333
  %v1335 = vsub.f32 1.0, %v1334
  %v1336 = vmul.f32 %v1333, %v1335
  %v1337 = vadd.f32 %v1333, %v1336
  %vm1338 = vweird.f32 %v1332
  %vm1339 = vweird.f32 %v1333
  %vm1340 = vmor %vm1338, %vm1339
  %v1341 = vsel %vm1340, %v1333, %v1337
  %v1342 = vand.u32 2147483647, %v1332
  %vm1343 = vcmp.eq.f32.partialorder %v1342, 8.507059e+37
  %v1344 = vand.u32 %v1332, 2147483648
  %v1345 = vor.u32 1.1754944e-38, %v1344
  %v1346 = vsel %vm1343, %v1345, %v1341
  %v1347 = vmul.f32 1.0, %v1346
  %v1348 = vadd.f32 %v1326, %v161
  %1350 = vrot.lane.b32.xlu0 %v1348, 64
  %v1351 = vpop.permute.xlu0 %1350
  %v1353 = vmul.f32 %v1347, %v1351
  %1355 = vrot.lane.b32.xlu0 %v1353, 64
  %v1356 = vpop.permute.xlu0 %1355
  %v1358 = vadd.f32 %v108, %v1356
  %v1359 = vtanh.pop %v1358
  %v1360 = vsub.f32 1.0, %v1347
  %1362 = vrot.lane.b32.xlu0 %v1359, 96
  %v1363 = vpop.permute.xlu0 %1362
  %v1365 = vmul.f32 %v1360, %v1363
  %v1366 = vmul.f32 %v1347, %v1172
  %v1367 = vadd.f32 %v1365, %v1366
  %1369 = vrot.lane.b32.xlu0 %v1367, 96
  %v1370 = vpop.permute.xlu0 %1369
  %v1371 = vsel %vm114, %v1370, 0
  %1373 = vmatpush.msra.mxu0 0.0
  %1374 = vmatpush.msra.mxu0 0.0
  %1375 = vmatpush.msra.mxu0 0.0
  %1376 = vmatpush.msra.mxu0 0.0
  %1377 = vmatpush.msra.mxu0 0.0
  %1378 = vmatpush.msra.mxu0 0.0
  %1379 = vmatpush.msra.mxu0 0.0
  %1380 = vmatpush.msra.mxu0 0.0
  %1381 = vmatpush.msra.mxu0 0.0
  %1382 = vmatpush.msra.mxu0 0.0
  %1383 = vmatpush.msra.mxu0 0.0
  %1384 = vmatpush.msra.mxu0 0.0
  %1385 = vmatpush.msra.mxu0 %v25
  %1386 = vmatpush.msra.mxu0 %v24
  %1387 = vmatpush.msra.mxu0 %v23
  %1388 = vmatpush.msra.mxu0 %v22
  %1389 = vmatmul.f32.gmra.mxu0 %v1371
  %v1390 = vpop.f32.mrf.mxu0
  %v1391 = vadd.f32 %v186, %v1390
  %1392 = vdwg.mxu0
  %v1393 = vtanh.pop %v1391
  %v1395 = vsel %vm214, %v1393, 0
  %1397 = vmatpush.msra.mxu0 0.0
  %1398 = vmatpush.msra.mxu0 0.0
  %1399 = vmatpush.msra.mxu0 0.0
  %1400 = vmatpush.msra.mxu0 0.0
  %1401 = vmatpush.msra.mxu0 0.0
  %1402 = vmatpush.msra.mxu0 0.0
  %1403 = vmatpush.msra.mxu0 0.0
  %1404 = vmatpush.msra.mxu0 0.0
  %1405 = vmatpush.msra.mxu0 0.0
  %1406 = vmatpush.msra.mxu0 0.0
  %1407 = vmatpush.msra.mxu0 0.0
  %1408 = vmatpush.msra.mxu0 0.0
  %1409 = vmatpush.msra.mxu0 0.0
  %1410 = vmatpush.msra.mxu0 0.0
  %1411 = vmatpush.msra.mxu0 %v28
  %1412 = vmatpush.msra.mxu0 %v27
  %1413 = vmatmul.f32.gmra.mxu0 %v1395
  %v1414 = vpop.f32.mrf.mxu0
  %v1415 = vadd.f32 %v213, %v1414
  %1416 = vdwg.mxu0
  %1417 = vmatpush.msra.mxu0 0.0
  %1418 = vmatpush.msra.mxu0 0.0
  %1419 = vmatpush.msra.mxu0 0.0
  %1420 = vmatpush.msra.mxu0 0.0
  %1421 = vmatpush.msra.mxu0 0.0
  %1422 = vmatpush.msra.mxu0 0.0
  %1423 = vmatpush.msra.mxu0 0.0
  %1424 = vmatpush.msra.mxu0 0.0
  %1425 = vmatpush.msra.mxu0 0.0
  %1426 = vmatpush.msra.mxu0 0.0
  %1427 = vmatpush.msra.mxu0 0.0
  %1428 = vmatpush.msra.mxu0 0.0
  %1429 = vmatpush.msra.mxu0 %v32
  %1430 = vmatpush.msra.mxu0 %v31
  %1431 = vmatpush.msra.mxu0 %v30
  %1432 = vmatpush.msra.mxu0 %v29
  %1433 = vmatmul.f32.gmra.mxu0 %v1285
  %v1434 = vpop.f32.mrf.mxu0
  %v1435 = vadd.f32 0.0, %v1434
  %1436 = vdwg.mxu0
  %v1437 = vadd.f32 %v1415, %v1435
  %v1438 = vxor.u32 %v1437, 2147483648
  %v1439 = vmul.f32 %v1438, 1.442695
  %v1440 = vpow.pop %v1439
  %v1441 = vadd.f32 %v1440, 1.0
  %v1442 = vrcp.pop %v1441
  %v1443 = vmul.f32 %v1441, %v1442
  %v1444 = vsub.f32 1.0, %v1443
  %v1445 = vmul.f32 %v1442, %v1444
  %v1446 = vadd.f32 %v1442, %v1445
  %vm1447 = vweird.f32 %v1441
  %vm1448 = vweird.f32 %v1442
  %vm1449 = vmor %vm1447, %vm1448
  %v1450 = vsel %vm1449, %v1442, %v1446
  %v1451 = vand.u32 2147483647, %v1441
  %vm1452 = vcmp.eq.f32.partialorder %v1451, 8.507059e+37
  %v1453 = vand.u32 %v1441, 2147483648
  %v1454 = vor.u32 1.1754944e-38, %v1453
  %v1455 = vsel %vm1452, %v1454, %v1450
  %v1456 = vmul.f32 1.0, %v1455
  %v1457 = vadd.f32 %v1435, %v284
  %1459 = vrot.lane.b32.xlu0 %v1457, 64
  %v1460 = vpop.permute.xlu0 %1459
  %v1462 = vmul.f32 %v1456, %v1460
  %1464 = vrot.lane.b32.xlu0 %v1462, 64
  %v1465 = vpop.permute.xlu0 %1464
  %v1467 = vadd.f32 %v1415, %v1465
  %v1468 = vtanh.pop %v1467
  %v1469 = vsub.f32 1.0, %v1456
  %1471 = vrot.lane.b32.xlu0 %v1468, 96
  %v1472 = vpop.permute.xlu0 %1471
  %v1474 = vmul.f32 %v1469, %v1472
  %v1475 = vmul.f32 %v1456, %v1281
  %v1476 = vadd.f32 %v1474, %v1475
  %1478 = vrot.lane.b32.xlu0 %v1476, 96
  %v1479 = vpop.permute.xlu0 %1478
  %v1480 = vsel %vm114, %v1479, 0
  %1482 = vmatpush.msra.mxu0 0.0
  %1483 = vmatpush.msra.mxu0 0.0
  %1484 = vmatpush.msra.mxu0 0.0
  %1485 = vmatpush.msra.mxu0 0.0
  %1486 = vmatpush.msra.mxu0 0.0
  %1487 = vmatpush.msra.mxu0 0.0
  %1488 = vmatpush.msra.mxu0 0.0
  %1489 = vmatpush.msra.mxu0 0.0
  %1490 = vmatpush.msra.mxu0 0.0
  %1491 = vmatpush.msra.mxu0 0.0
  %1492 = vmatpush.msra.mxu0 0.0
  %1493 = vmatpush.msra.mxu0 0.0
  %1494 = vmatpush.msra.mxu0 %v36
  %1495 = vmatpush.msra.mxu0 %v35
  %1496 = vmatpush.msra.mxu0 %v34
  %1497 = vmatpush.msra.mxu0 %v33
  %1498 = vmatmul.f32.gmra.mxu0 %v1480
  %v1499 = vpop.f32.mrf.mxu0
  %v1500 = vadd.f32 %v306, %v1499
  %1501 = vdwg.mxu0
  %v1502 = vtanh.pop %v1500
  %1503 = vmatpush.msra.mxu0 0.0
  %1504 = vmatpush.msra.mxu0 0.0
  %1505 = vmatpush.msra.mxu0 0.0
  %1506 = vmatpush.msra.mxu0 0.0
  %1507 = vmatpush.msra.mxu0 0.0
  %1508 = vmatpush.msra.mxu0 0.0
  %1509 = vmatpush.msra.mxu0 0.0
  %1510 = vmatpush.msra.mxu0 0.0
  %1511 = vmatpush.msra.mxu0 0.0
  %1512 = vmatpush.msra.mxu0 0.0
  %1513 = vmatpush.msra.mxu0 0.0
  %1514 = vmatpush.msra.mxu0 0.0
  %1515 = vmatpush.msra.mxu0 %v21
  %1516 = vmatpush.msra.mxu0 %v20
  %1517 = vmatpush.msra.mxu0 %v19
  %1518 = vmatpush.msra.mxu0 %v18
  %1519 = vmatmul.f32.gmra.mxu0 %v1371
  %v1520 = vpop.f32.mrf.mxu0
  %v1521 = vadd.f32 0.0, %v1520
  %1522 = vdwg.mxu0
  %v1523 = vadd.f32 %v111, %v1521
  %v1524 = vxor.u32 %v1523, 2147483648
  %v1525 = vmul.f32 %v1524, 1.442695
  %v1526 = vpow.pop %v1525
  %v1527 = vadd.f32 %v1526, 1.0
  %v1528 = vrcp.pop %v1527
  %v1529 = vmul.f32 %v1527, %v1528
  %v1530 = vsub.f32 1.0, %v1529
  %v1531 = vmul.f32 %v1528, %v1530
  %v1532 = vadd.f32 %v1528, %v1531
  %vm1533 = vweird.f32 %v1527
  %vm1534 = vweird.f32 %v1528
  %vm1535 = vmor %vm1533, %vm1534
  %v1536 = vsel %vm1535, %v1528, %v1532
  %v1537 = vand.u32 2147483647, %v1527
  %vm1538 = vcmp.eq.f32.partialorder %v1537, 8.507059e+37
  %v1539 = vand.u32 %v1527, 2147483648
  %v1540 = vor.u32 1.1754944e-38, %v1539
  %v1541 = vsel %vm1538, %v1540, %v1536
  %v1542 = vmul.f32 1.0, %v1541
  %v1543 = vadd.f32 %v1521, %v161
  %1545 = vrot.lane.b32.xlu0 %v1543, 64
  %v1546 = vpop.permute.xlu0 %1545
  %v1548 = vmul.f32 %v1542, %v1546
  %1550 = vrot.lane.b32.xlu0 %v1548, 64
  %v1551 = vpop.permute.xlu0 %1550
  %v1553 = vadd.f32 %v111, %v1551
  %v1554 = vtanh.pop %v1553
  %v1555 = vsub.f32 1.0, %v1542
  %1557 = vrot.lane.b32.xlu0 %v1554, 96
  %v1558 = vpop.permute.xlu0 %1557
  %v1560 = vmul.f32 %v1555, %v1558
  %v1561 = vmul.f32 %v1542, %v1367
  %v1562 = vadd.f32 %v1560, %v1561
  %1564 = vrot.lane.b32.xlu0 %v1562, 96
  %v1565 = vpop.permute.xlu0 %1564
  %v1566 = vsel %vm114, %v1565, 0
  %1568 = vmatpush.msra.mxu0 0.0
  %1569 = vmatpush.msra.mxu0 0.0
  %1570 = vmatpush.msra.mxu0 0.0
  %1571 = vmatpush.msra.mxu0 0.0
  %1572 = vmatpush.msra.mxu0 0.0
  %1573 = vmatpush.msra.mxu0 0.0
  %1574 = vmatpush.msra.mxu0 0.0
  %1575 = vmatpush.msra.mxu0 0.0
  %1576 = vmatpush.msra.mxu0 0.0
  %1577 = vmatpush.msra.mxu0 0.0
  %1578 = vmatpush.msra.mxu0 0.0
  %1579 = vmatpush.msra.mxu0 0.0
  %1580 = vmatpush.msra.mxu0 %v25
  %1581 = vmatpush.msra.mxu0 %v24
  %1582 = vmatpush.msra.mxu0 %v23
  %1583 = vmatpush.msra.mxu0 %v22
  %1584 = vmatmul.f32.gmra.mxu0 %v1566
  %v1585 = vpop.f32.mrf.mxu0
  %v1586 = vadd.f32 %v186, %v1585
  %1587 = vdwg.mxu0
  %v1588 = vtanh.pop %v1586
  %v1590 = vsel %vm214, %v1588, 0
  %1592 = vmatpush.msra.mxu0 0.0
  %1593 = vmatpush.msra.mxu0 0.0
  %1594 = vmatpush.msra.mxu0 0.0
  %1595 = vmatpush.msra.mxu0 0.0
  %1596 = vmatpush.msra.mxu0 0.0
  %1597 = vmatpush.msra.mxu0 0.0
  %1598 = vmatpush.msra.mxu0 0.0
  %1599 = vmatpush.msra.mxu0 0.0
  %1600 = vmatpush.msra.mxu0 0.0
  %1601 = vmatpush.msra.mxu0 0.0
  %1602 = vmatpush.msra.mxu0 0.0
  %1603 = vmatpush.msra.mxu0 0.0
  %1604 = vmatpush.msra.mxu0 0.0
  %1605 = vmatpush.msra.mxu0 0.0
  %1606 = vmatpush.msra.mxu0 %v28
  %1607 = vmatpush.msra.mxu0 %v27
  %1608 = vmatmul.f32.gmra.mxu0 %v1590
  %v1609 = vpop.f32.mrf.mxu0
  %v1610 = vadd.f32 %v213, %v1609
  %1611 = vdwg.mxu0
  %1612 = vmatpush.msra.mxu0 0.0
  %1613 = vmatpush.msra.mxu0 0.0
  %1614 = vmatpush.msra.mxu0 0.0
  %1615 = vmatpush.msra.mxu0 0.0
  %1616 = vmatpush.msra.mxu0 0.0
  %1617 = vmatpush.msra.mxu0 0.0
  %1618 = vmatpush.msra.mxu0 0.0
  %1619 = vmatpush.msra.mxu0 0.0
  %1620 = vmatpush.msra.mxu0 0.0
  %1621 = vmatpush.msra.mxu0 0.0
  %1622 = vmatpush.msra.mxu0 0.0
  %1623 = vmatpush.msra.mxu0 0.0
  %1624 = vmatpush.msra.mxu0 %v32
  %1625 = vmatpush.msra.mxu0 %v31
  %1626 = vmatpush.msra.mxu0 %v30
  %1627 = vmatpush.msra.mxu0 %v29
  %1628 = vmatmul.f32.gmra.mxu0 %v1480
  %v1629 = vpop.f32.mrf.mxu0
  %v1630 = vadd.f32 0.0, %v1629
  %1631 = vdwg.mxu0
  %v1632 = vadd.f32 %v1610, %v1630
  %v1633 = vxor.u32 %v1632, 2147483648
  %v1634 = vmul.f32 %v1633, 1.442695
  %v1635 = vpow.pop %v1634
  %v1636 = vadd.f32 %v1635, 1.0
  %v1637 = vrcp.pop %v1636
  %v1638 = vmul.f32 %v1636, %v1637
  %v1639 = vsub.f32 1.0, %v1638
  %v1640 = vmul.f32 %v1637, %v1639
  %v1641 = vadd.f32 %v1637, %v1640
  %vm1642 = vweird.f32 %v1636
  %vm1643 = vweird.f32 %v1637
  %vm1644 = vmor %vm1642, %vm1643
  %v1645 = vsel %vm1644, %v1637, %v1641
  %v1646 = vand.u32 2147483647, %v1636
  %vm1647 = vcmp.eq.f32.partialorder %v1646, 8.507059e+37
  %v1648 = vand.u32 %v1636, 2147483648
  %v1649 = vor.u32 1.1754944e-38, %v1648
  %v1650 = vsel %vm1647, %v1649, %v1645
  %v1651 = vmul.f32 1.0, %v1650
  %v1652 = vadd.f32 %v1630, %v284
  %1654 = vrot.lane.b32.xlu0 %v1652, 64
  %v1655 = vpop.permute.xlu0 %1654
  %v1657 = vmul.f32 %v1651, %v1655
  %1659 = vrot.lane.b32.xlu0 %v1657, 64
  %v1660 = vpop.permute.xlu0 %1659
  %v1662 = vadd.f32 %v1610, %v1660
  %v1663 = vtanh.pop %v1662
  %v1664 = vsub.f32 1.0, %v1651
  %1666 = vrot.lane.b32.xlu0 %v1663, 96
  %v1667 = vpop.permute.xlu0 %1666
  %v1669 = vmul.f32 %v1664, %v1667
  %v1670 = vmul.f32 %v1651, %v1476
  %v1671 = vadd.f32 %v1669, %v1670
  %1673 = vrot.lane.b32.xlu0 %v1671, 96
  %v1674 = vpop.permute.xlu0 %1673
  %v1675 = vsel %vm114, %v1674, 0
  %1677 = vmatpush.msra.mxu0 0.0
  %1678 = vmatpush.msra.mxu0 0.0
  %1679 = vmatpush.msra.mxu0 0.0
  %1680 = vmatpush.msra.mxu0 0.0
  %1681 = vmatpush.msra.mxu0 0.0
  %1682 = vmatpush.msra.mxu0 0.0
  %1683 = vmatpush.msra.mxu0 0.0
  %1684 = vmatpush.msra.mxu0 0.0
  %1685 = vmatpush.msra.mxu0 0.0
  %1686 = vmatpush.msra.mxu0 0.0
  %1687 = vmatpush.msra.mxu0 0.0
  %1688 = vmatpush.msra.mxu0 0.0
  %1689 = vmatpush.msra.mxu0 %v36
  %1690 = vmatpush.msra.mxu0 %v35
  %1691 = vmatpush.msra.mxu0 %v34
  %1692 = vmatpush.msra.mxu0 %v33
  %1693 = vmatmul.f32.gmra.mxu0 %v1675
  %v1694 = vpop.f32.mrf.mxu0
  %v1695 = vadd.f32 %v306, %v1694
  %1696 = vdwg.mxu0
  %v1697 = vtanh.pop %v1695
  %1698 = vst.msk [vmem:[%s4] sm:$0xff] %vm214, %v332
  %1699 = vst.msk [vmem:[%s4 + $0x8] sm:$0xff] %vm214, %v527
  %1700 = vst.msk [vmem:[%s4 + $0x10] sm:$0xff] %vm214, %v722
  %1701 = vst.msk [vmem:[%s4 + $0x18] sm:$0xff] %vm214, %v917
  %1702 = vst.msk [vmem:[%s4 + $0x20] sm:$0xff] %vm214, %v1112
  %1703 = vst.msk [vmem:[%s4 + $0x28] sm:$0xff] %vm214, %v1307
  %1704 = vst.msk [vmem:[%s4 + $0x30] sm:$0xff] %vm214, %v1502
  %1705 = vst.msk [vmem:[%s4 + $0x38] sm:$0xff] %vm214, %v1697
  // Predicated region
  $region18: #{tracking_forward_pallas.1} parent=0 // pred_check
    _
  $region19: #{tracking_forward_pallas.1} parent=0 // pred_check_branch
    %1707 = sbr.rel (0) target = $region21
  $region20: #{tracking_forward_pallas.1} parent=0 // pred_region
    _
  $region21: #{tracking_forward_pallas.1} parent=0 // pred_fallthru
    _
  // Predicated region
  $region22: #{tracking_forward_pallas.1} parent=0 // pred_check
    _
  $region23: #{tracking_forward_pallas.1} parent=0 // pred_check_branch
    %1709 = sbr.rel (0) target = $region25
  $region24: #{tracking_forward_pallas.1} parent=0 // pred_region
    _
  $region25: #{tracking_forward_pallas.1} parent=0 // pred_fallthru
    _

</llo_original>
